<compile_context>
chip_gen: v6e
topology: v6e:2x2x1
jax: 0.10.0
libtpu: 0.0.40
codegen_flags: <defaults>
</compile_context>

<pallas_src>
import functools

import jax
import jax.numpy as jnp
from jax.experimental import pallas as pl
from jax.experimental.pallas import tpu as pltpu


def _gelu_tanh(x):
    # tanh-form GELU (runs on the EUP); max abs deviation from erf-GELU ~3e-4.
    c = 0.7978845608028654  # sqrt(2/pi)
    return 0.5 * x * (1.0 + jnp.tanh(c * (x + 0.044715 * x * x * x)))


def _groupnorm1(x, w, b, eps=1e-5):
    # GroupNorm with a single group over the whole (channels, T) slab,
    # single-pass statistics. x: (Ch, T) f32; w/b: (Ch, 1) f32.
    n = float(x.shape[0] * x.shape[1])
    s = jnp.sum(x, keepdims=True)                       # (1, 1)
    ss = jnp.sum(x * x, keepdims=True)                  # (1, 1)
    mean = s * (1.0 / n)
    var = jnp.maximum(ss * (1.0 / n) - mean * mean, 0.0)
    return (x - mean) * jax.lax.rsqrt(var + eps) * w + b


_PARAM_ORDER = ("w1f", "b1", "g1w", "g1b", "w2a", "w2b", "b2a", "b2b",
                "g2wa", "g2wb", "g2ba", "g2bb", "scale")
_NP = len(_PARAM_ORDER)  # 13 params per layer


def _dconv_kernel(x_ref, *refs, dilations, C, H, T):
    """All residual DConv layers for one batch element, fully fused.

    x_ref : (1, C, T) un-padded input block.
    per layer (13 refs): w1f (3H, C) bf16 fused-tap conv weight; b1/g1w/g1b (H, 1) f32;
      w2a/w2b (C, H) bf16 value/gate halves of the 1x1 conv; b2a/b2b, g2wa/g2wb,
      g2ba/g2bb (C, 1) f32; scale (C, 1) f32.
    last ref: o_ref (1, C, T).
    """
    o_ref = refs[-1]
    prefs = refs[:-1]

    xf = x_ref[0].astype(jnp.float32)                               # (C, T) residual stream
    col = jax.lax.broadcasted_iota(jnp.int32, (1, T), 1)            # lane index, for padding masks

    for li, dil in enumerate(dilations):
        (w1f, b1, g1w, g1b, w2a, w2b, b2a, b2b,
         g2wa, g2wb, g2ba, g2bb, sca) = prefs[li * _NP:(li + 1) * _NP]

        xb = xf.astype(jnp.bfloat16)                                # bf16 operand for the MXU

        # --- dilated Conv1d(C -> H, k=3): one fused (3H, C) x (C, T) bf16 matmul;
        #     tap shifts done by rolling the small (H, T) outputs + boundary masks ---
        y3 = jnp.dot(w1f[...], xb, preferred_element_type=jnp.float32)   # (3H, T) f32

        h = y3[H:2 * H]                                              # center tap (no shift)
        left = pltpu.roll(y3[0:H], dil, axis=1)                      # tap 0 -> x[t - dil]
        h = h + jnp.where(col >= dil, left, 0.0)
        right = pltpu.roll(y3[2 * H:3 * H], T - dil, axis=1)         # tap 2 -> x[t + dil]
        h = h + jnp.where(col < T - dil, right, 0.0)
        h = h + b1[...]

        # --- GroupNorm(1, H) + GELU ---
        h = _groupnorm1(h, g1w[...], g1b[...])
        h = _gelu_tanh(h)

        # --- 1x1 Conv1d(H -> 2C), pre-split into GLU value/gate halves (the (2C, T)
        #     tensor is never materialized and never sliced) ---
        hb = h.astype(jnp.bfloat16)
        ya = jnp.dot(w2a[...], hb, preferred_element_type=jnp.float32) + b2a[...]
        yb = jnp.dot(w2b[...], hb, preferred_element_type=jnp.float32) + b2b[...]

        # --- GroupNorm(1, 2C): joint single-pass stats over both halves ---
        n2 = float(2 * C * T)
        s = jnp.sum(ya, keepdims=True) + jnp.sum(yb, keepdims=True)
        ss = jnp.sum(ya * ya, keepdims=True) + jnp.sum(yb * yb, keepdims=True)
        mean = s * (1.0 / n2)
        var = jnp.maximum(ss * (1.0 / n2) - mean * mean, 0.0)
        inv = jax.lax.rsqrt(var + 1e-5)
        ya = (ya - mean) * inv * g2wa[...] + g2ba[...]
        yb = (yb - mean) * inv * g2wb[...] + g2bb[...]

        # --- GLU + LayerScale + residual ---
        xf = xf + sca[...] * (ya * jax.nn.sigmoid(yb))

    o_ref[0] = xf.astype(o_ref.dtype)


def dconv_forward(x, kernel_params, dilate=True):
    """DConv.forward: all residual layers fused into a single pallas_call."""
    B, C, T = x.shape
    depth = len(kernel_params)
    H = kernel_params[0]["w1f"].shape[0] // 3
    dilations = tuple((2 ** d) if dilate else 1 for d in range(depth))

    flat = []
    in_specs = [pl.BlockSpec((1, C, T), lambda b: (b, 0, 0))]
    for p in kernel_params:
        for name in _PARAM_ORDER:
            arr = p[name]
            flat.append(arr)
            # constant index map -> weights DMA'd once, shared across the batch grid
            in_specs.append(pl.BlockSpec(arr.shape, lambda b: (0, 0)))

    kernel = functools.partial(_dconv_kernel, dilations=dilations, C=C, H=H, T=T)
    return pl.pallas_call(
        kernel,
        out_shape=jax.ShapeDtypeStruct((B, C, T), x.dtype),
        grid=(B,),
        in_specs=in_specs,
        out_specs=pl.BlockSpec((1, C, T), lambda b: (b, 0, 0)),
        compiler_params=pltpu.CompilerParams(
            dimension_semantics=("parallel",),
            vmem_limit_bytes=32 * 1024 * 1024,
        ),
    )(x, *flat)


# --------------------------- parameter handling ------------------------------

def init_dconv_params(key, channels, compress=4, depth=2, init=1e-4, kernel=3):
    """Logical (PyTorch-layout) params. Conv weights are bf16 (same values used by
    both the kernel and the f32 reference)."""
    hidden = int(channels / compress)
    layers = []
    for d in range(depth):
        k = jax.random.fold_in(key, d)
        k1, k2, k3, k4, k5, k6, k7, k8 = jax.random.split(k, 8)
        layers.append(dict(
            w1=(0.1 * jax.random.normal(k1, (kernel, hidden, channels), jnp.float32)
                ).astype(jnp.bfloat16),
            b1=0.1 * jax.random.normal(k2, (hidden, 1), jnp.float32),
            g1w=1.0 + 0.1 * jax.random.normal(k3, (hidden, 1), jnp.float32),
            g1b=0.1 * jax.random.normal(k4, (hidden, 1), jnp.float32),
            w2=(0.1 * jax.random.normal(k5, (2 * channels, hidden), jnp.float32)
                ).astype(jnp.bfloat16),
            b2=0.1 * jax.random.normal(k6, (2 * channels, 1), jnp.float32),
            g2w=1.0 + 0.1 * jax.random.normal(k7, (2 * channels, 1), jnp.float32),
            g2b=0.1 * jax.random.normal(k8, (2 * channels, 1), jnp.float32),
            scale=jnp.full((channels, 1), init, jnp.float32),
        ))
    return layers


def prep_kernel_params(layers):
    """Kernel-friendly layout: fused conv taps, GLU value/gate halves pre-split."""
    out = []
    for p in layers:
        K, H, C = p["w1"].shape
        out.append(dict(
            w1f=p["w1"].reshape(K * H, C),              # (3H, C) bf16
            b1=p["b1"], g1w=p["g1w"], g1b=p["g1b"],
            w2a=p["w2"][:C], w2b=p["w2"][C:],           # (C, H) bf16 each
            b2a=p["b2"][:C], b2b=p["b2"][C:],
            g2wa=p["g2w"][:C], g2wb=p["g2w"][C:],
            g2ba=p["g2b"][:C], g2bb=p["g2b"][C:],
            scale=p["scale"],
        ))
    return out


# ------------------------- pure-JAX reference --------------------------------

def _ref_groupnorm1(x, w, b, eps=1e-5):
    mean = jnp.mean(x, axis=(1, 2), keepdims=True)
    var = jnp.mean((x - mean) ** 2, axis=(1, 2), keepdims=True)
    return (x - mean) / jnp.sqrt(var + eps) * w[None] + b[None]


def ref_dconv(x, layer_params, dilate=True):
    from jax.scipy.special import erf
    for d, p in enumerate(layer_params):
        dilation = 2 ** d if dilate else 1
        B, C, T = x.shape
        pad = dilation
        xp = jnp.pad(x, ((0, 0), (0, 0), (pad, pad)))
        w1 = p["w1"].astype(jnp.float32)
        h = p["b1"][None]
        for k in range(3):
            xs = xp[:, :, k * dilation:k * dilation + T]
            h = h + jnp.einsum("hc,bct->bht", w1[k], xs)
        h = _ref_groupnorm1(h, p["g1w"], p["g1b"])
        h = 0.5 * h * (1.0 + erf(h / jnp.sqrt(2.0)))        # exact (PyTorch-default) GELU
        y = jnp.einsum("oh,bht->bot", p["w2"].astype(jnp.float32), h) + p["b2"][None]
        y = _ref_groupnorm1(y, p["g2w"], p["g2b"])
        a, g = y[:, :C], y[:, C:]
        x = x + p["scale"][None] * (a * jax.nn.sigmoid(g))
    return x


# ------------------------------- main -----------------------------------------

if __name__ == "__main__":
    B, C, T = 2, 16, 32            # hidden = 16 // 4 = 4, depth = 2, dilations (1, 2)
    init_scale = 1e-4
    key = jax.random.PRNGKey(0)
    kx, kp = jax.random.split(key)
    x = jax.random.normal(kx, (B, C, T), jnp.float32)
    params = init_dconv_params(kp, C, init=init_scale)
    kparams = prep_kernel_params(params)

    out = jax.block_until_ready(dconv_forward(x, kparams))
    ref = jax.block_until_ready(ref_dconv(x, params))

    assert out.shape == (B, C, T) and out.dtype == jnp.float32
    assert jnp.allclose(out, ref, atol=1e-3, rtol=1e-3), float(jnp.max(jnp.abs(out - ref)))
    # Scale-normalized check of the residual branch itself (meaningful despite the
    # tiny LayerScale init); tolerance covers bf16 MXU inputs + tanh-GELU.
    kb = (out - x) / init_scale
    rb = (ref - x) / init_scale
    assert jnp.allclose(kb, rb, atol=7.5e-2, rtol=5e-2), float(jnp.max(jnp.abs(kb - rb)))
    print("KERNEL_OK")
</pallas_src>

<mosaic_0001>
module attributes {stable_mosaic.version = 11 : i64} {
  func.func @_dconv_kernel(%arg0: i32, %arg1: memref<1x16x32xf32, #tpu.memory_space<vmem>>, %arg2: memref<12x16xbf16, #tpu.memory_space<vmem>>, %arg3: memref<4x1xf32, #tpu.memory_space<vmem>>, %arg4: memref<4x1xf32, #tpu.memory_space<vmem>>, %arg5: memref<4x1xf32, #tpu.memory_space<vmem>>, %arg6: memref<16x4xbf16, #tpu.memory_space<vmem>>, %arg7: memref<16x4xbf16, #tpu.memory_space<vmem>>, %arg8: memref<16x1xf32, #tpu.memory_space<vmem>>, %arg9: memref<16x1xf32, #tpu.memory_space<vmem>>, %arg10: memref<16x1xf32, #tpu.memory_space<vmem>>, %arg11: memref<16x1xf32, #tpu.memory_space<vmem>>, %arg12: memref<16x1xf32, #tpu.memory_space<vmem>>, %arg13: memref<16x1xf32, #tpu.memory_space<vmem>>, %arg14: memref<16x1xf32, #tpu.memory_space<vmem>>, %arg15: memref<12x16xbf16, #tpu.memory_space<vmem>>, %arg16: memref<4x1xf32, #tpu.memory_space<vmem>>, %arg17: memref<4x1xf32, #tpu.memory_space<vmem>>, %arg18: memref<4x1xf32, #tpu.memory_space<vmem>>, %arg19: memref<16x4xbf16, #tpu.memory_space<vmem>>, %arg20: memref<16x4xbf16, #tpu.memory_space<vmem>>, %arg21: memref<16x1xf32, #tpu.memory_space<vmem>>, %arg22: memref<16x1xf32, #tpu.memory_space<vmem>>, %arg23: memref<16x1xf32, #tpu.memory_space<vmem>>, %arg24: memref<16x1xf32, #tpu.memory_space<vmem>>, %arg25: memref<16x1xf32, #tpu.memory_space<vmem>>, %arg26: memref<16x1xf32, #tpu.memory_space<vmem>>, %arg27: memref<16x1xf32, #tpu.memory_space<vmem>>, %arg28: memref<1x16x32xf32, #tpu.memory_space<vmem>>) attributes {dimension_semantics = [#tpu.dimension_semantics<parallel>], iteration_bounds = array<i64: 2>, scalar_prefetch = 0 : i64, scratch_operands = 0 : i64, tpu.core_type = #tpu.core_type<tc>, window_params = [{transform_indices = @transform_0, window_bounds = array<i64: 1, 16, 32>}, {pipeline_mode = #tpu.pipeline_mode<synchronous>, transform_indices = @transform_1, window_bounds = array<i64: 12, 16>}, {pipeline_mode = #tpu.pipeline_mode<synchronous>, transform_indices = @transform_2, window_bounds = array<i64: 4, 1>}, {pipeline_mode = #tpu.pipeline_mode<synchronous>, transform_indices = @transform_3, window_bounds = array<i64: 4, 1>}, {pipeline_mode = #tpu.pipeline_mode<synchronous>, transform_indices = @transform_4, window_bounds = array<i64: 4, 1>}, {pipeline_mode = #tpu.pipeline_mode<synchronous>, transform_indices = @transform_5, window_bounds = array<i64: 16, 4>}, {pipeline_mode = #tpu.pipeline_mode<synchronous>, transform_indices = @transform_6, window_bounds = array<i64: 16, 4>}, {pipeline_mode = #tpu.pipeline_mode<synchronous>, transform_indices = @transform_7, window_bounds = array<i64: 16, 1>}, {pipeline_mode = #tpu.pipeline_mode<synchronous>, transform_indices = @transform_8, window_bounds = array<i64: 16, 1>}, {pipeline_mode = #tpu.pipeline_mode<synchronous>, transform_indices = @transform_9, window_bounds = array<i64: 16, 1>}, {pipeline_mode = #tpu.pipeline_mode<synchronous>, transform_indices = @transform_10, window_bounds = array<i64: 16, 1>}, {pipeline_mode = #tpu.pipeline_mode<synchronous>, transform_indices = @transform_11, window_bounds = array<i64: 16, 1>}, {pipeline_mode = #tpu.pipeline_mode<synchronous>, transform_indices = @transform_12, window_bounds = array<i64: 16, 1>}, {pipeline_mode = #tpu.pipeline_mode<synchronous>, transform_indices = @transform_13, window_bounds = array<i64: 16, 1>}, {pipeline_mode = #tpu.pipeline_mode<synchronous>, transform_indices = @transform_14, window_bounds = array<i64: 12, 16>}, {pipeline_mode = #tpu.pipeline_mode<synchronous>, transform_indices = @transform_15, window_bounds = array<i64: 4, 1>}, {pipeline_mode = #tpu.pipeline_mode<synchronous>, transform_indices = @transform_16, window_bounds = array<i64: 4, 1>}, {pipeline_mode = #tpu.pipeline_mode<synchronous>, transform_indices = @transform_17, window_bounds = array<i64: 4, 1>}, {pipeline_mode = #tpu.pipeline_mode<synchronous>, transform_indices = @transform_18, window_bounds = array<i64: 16, 4>}, {pipeline_mode = #tpu.pipeline_mode<synchronous>, transform_indices = @transform_19, window_bounds = array<i64: 16, 4>}, {pipeline_mode = #tpu.pipeline_mode<synchronous>, transform_indices = @transform_20, window_bounds = array<i64: 16, 1>}, {pipeline_mode = #tpu.pipeline_mode<synchronous>, transform_indices = @transform_21, window_bounds = array<i64: 16, 1>}, {pipeline_mode = #tpu.pipeline_mode<synchronous>, transform_indices = @transform_22, window_bounds = array<i64: 16, 1>}, {pipeline_mode = #tpu.pipeline_mode<synchronous>, transform_indices = @transform_23, window_bounds = array<i64: 16, 1>}, {pipeline_mode = #tpu.pipeline_mode<synchronous>, transform_indices = @transform_24, window_bounds = array<i64: 16, 1>}, {pipeline_mode = #tpu.pipeline_mode<synchronous>, transform_indices = @transform_25, window_bounds = array<i64: 16, 1>}, {pipeline_mode = #tpu.pipeline_mode<synchronous>, transform_indices = @transform_26, window_bounds = array<i64: 16, 1>}, {transform_indices = @transform_27, window_bounds = array<i64: 1, 16, 32>}]} {
    %c0 = arith.constant 0 : index
    %c0_0 = arith.constant 0 : index
    %c0_1 = arith.constant 0 : index
    %0 = vector.load %arg1[%c0, %c0_0, %c0_1] : memref<1x16x32xf32, #tpu.memory_space<vmem>>, vector<1x16x32xf32>
    %1 = vector.shape_cast %0 : vector<1x16x32xf32> to vector<16x32xf32>
    %2 = tpu.iota {dimensions = array<i32: 1>} : vector<1x32xi32>
    %3 = arith.truncf %1 : vector<16x32xf32> to vector<16x32xbf16>
    %c0_2 = arith.constant 0 : index
    %c0_3 = arith.constant 0 : index
    %4 = vector.load %arg2[%c0_2, %c0_3] : memref<12x16xbf16, #tpu.memory_space<vmem>>, vector<12x16xbf16>
    %cst = arith.constant dense<0.000000e+00> : vector<12x32xf32>
    %5 = tpu.matmul %4, %3, %cst {dimension_numbers = #tpu.dot_dimension_numbers<[1], [0], [0], [1], [0, 0, 1, 1], [], []>} : vector<12x16xbf16>, vector<16x32xbf16>, vector<12x32xf32> -> vector<12x32xf32>
    %6 = vector.extract_strided_slice %5 {offsets = [4, 0], sizes = [4, 32], strides = [1, 1]} : vector<12x32xf32> to vector<4x32xf32>
    %7 = vector.extract_strided_slice %5 {offsets = [0, 0], sizes = [4, 32], strides = [1, 1]} : vector<12x32xf32> to vector<4x32xf32>
    %c1_i32 = arith.constant 1 : i32
    %8 = tpu.dynamic_rotate %7 by %c1_i32 dim 1 : vector<4x32xf32>, i32 -> vector<4x32xf32>
    %c1_i32_4 = arith.constant 1 : i32
    %9 = vector.broadcast %c1_i32_4 : i32 to vector<1x32xi32>
    %10 = arith.cmpi sge, %2, %9 : vector<1x32xi32>
    %cst_5 = arith.constant 0.000000e+00 : f32
    %11 = vector.shape_cast %10 : vector<1x32xi1> to vector<1x32xi1>
    %12 = vector.broadcast %11 : vector<1x32xi1> to vector<4x32xi1>
    %13 = vector.broadcast %cst_5 : f32 to vector<4x32xf32>
    %14 = arith.select %12, %8, %13 : vector<4x32xi1>, vector<4x32xf32>
    %15 = arith.addf %6, %14 : vector<4x32xf32>
    %16 = vector.extract_strided_slice %5 {offsets = [8, 0], sizes = [4, 32], strides = [1, 1]} : vector<12x32xf32> to vector<4x32xf32>
    %c31_i32 = arith.constant 31 : i32
    %17 = tpu.dynamic_rotate %16 by %c31_i32 dim 1 : vector<4x32xf32>, i32 -> vector<4x32xf32>
    %c31_i32_6 = arith.constant 31 : i32
    %18 = vector.broadcast %c31_i32_6 : i32 to vector<1x32xi32>
    %19 = arith.cmpi slt, %2, %18 : vector<1x32xi32>
    %cst_7 = arith.constant 0.000000e+00 : f32
    %20 = vector.shape_cast %19 : vector<1x32xi1> to vector<1x32xi1>
    %21 = vector.broadcast %20 : vector<1x32xi1> to vector<4x32xi1>
    %22 = vector.broadcast %cst_7 : f32 to vector<4x32xf32>
    %23 = arith.select %21, %17, %22 : vector<4x32xi1>, vector<4x32xf32>
    %24 = arith.addf %15, %23 : vector<4x32xf32>
    %c0_8 = arith.constant 0 : index
    %c0_9 = arith.constant 0 : index
    %25 = vector.load %arg3[%c0_8, %c0_9] : memref<4x1xf32, #tpu.memory_space<vmem>>, vector<4x1xf32>
    %26 = vector.broadcast %25 : vector<4x1xf32> to vector<4x32xf32>
    %27 = arith.addf %24, %26 : vector<4x32xf32>
    %c0_10 = arith.constant 0 : index
    %c0_11 = arith.constant 0 : index
    %28 = vector.load %arg4[%c0_10, %c0_11] : memref<4x1xf32, #tpu.memory_space<vmem>>, vector<4x1xf32>
    %c0_12 = arith.constant 0 : index
    %c0_13 = arith.constant 0 : index
    %29 = vector.load %arg5[%c0_12, %c0_13] : memref<4x1xf32, #tpu.memory_space<vmem>>, vector<4x1xf32>
    %30 = vector.shape_cast %27 : vector<4x32xf32> to vector<1x4x32xf32>
    %cst_14 = arith.constant dense<0.000000e+00> : vector<1xf32>
    %31 = vector.multi_reduction <add>, %30, %cst_14 [1, 2] : vector<1x4x32xf32> to vector<1xf32>
    %32 = vector.shape_cast %31 : vector<1xf32> to vector<1x1x1xf32>
    %33 = vector.extract %32[0, 0, 0] : f32 from vector<1x1x1xf32>
    %34 = vector.broadcast %33 : f32 to vector<1x1xf32>
    %35 = arith.mulf %27, %27 : vector<4x32xf32>
    %36 = vector.shape_cast %35 : vector<4x32xf32> to vector<1x4x32xf32>
    %cst_15 = arith.constant dense<0.000000e+00> : vector<1xf32>
    %37 = vector.multi_reduction <add>, %36, %cst_15 [1, 2] : vector<1x4x32xf32> to vector<1xf32>
    %38 = vector.shape_cast %37 : vector<1xf32> to vector<1x1x1xf32>
    %39 = vector.extract %38[0, 0, 0] : f32 from vector<1x1x1xf32>
    %40 = vector.broadcast %39 : f32 to vector<1x1xf32>
    %cst_16 = arith.constant 7.812500e-03 : f32
    %41 = vector.broadcast %cst_16 : f32 to vector<1x1xf32>
    %42 = arith.mulf %34, %41 : vector<1x1xf32>
    %cst_17 = arith.constant 7.812500e-03 : f32
    %43 = vector.broadcast %cst_17 : f32 to vector<1x1xf32>
    %44 = arith.mulf %40, %43 : vector<1x1xf32>
    %45 = arith.mulf %42, %42 : vector<1x1xf32>
    %46 = arith.subf %44, %45 : vector<1x1xf32>
    %cst_18 = arith.constant 0.000000e+00 : f32
    %47 = vector.broadcast %cst_18 : f32 to vector<1x1xf32>
    %48 = arith.maximumf %46, %47 : vector<1x1xf32>
    %49 = vector.broadcast %42 : vector<1x1xf32> to vector<4x32xf32>
    %50 = arith.subf %27, %49 : vector<4x32xf32>
    %cst_19 = arith.constant 9.99999974E-6 : f32
    %51 = vector.broadcast %cst_19 : f32 to vector<1x1xf32>
    %52 = arith.addf %48, %51 : vector<1x1xf32>
    %53 = math.rsqrt %52 : vector<1x1xf32>
    %54 = vector.broadcast %53 : vector<1x1xf32> to vector<4x32xf32>
    %55 = arith.mulf %50, %54 : vector<4x32xf32>
    %56 = vector.broadcast %28 : vector<4x1xf32> to vector<4x32xf32>
    %57 = arith.mulf %55, %56 : vector<4x32xf32>
    %58 = vector.broadcast %29 : vector<4x1xf32> to vector<4x32xf32>
    %59 = arith.addf %57, %58 : vector<4x32xf32>
    %cst_20 = arith.constant 5.000000e-01 : f32
    %60 = vector.broadcast %cst_20 : f32 to vector<4x32xf32>
    %61 = arith.mulf %60, %59 : vector<4x32xf32>
    %cst_21 = arith.constant 4.471500e-02 : f32
    %62 = vector.broadcast %cst_21 : f32 to vector<4x32xf32>
    %63 = arith.mulf %62, %59 : vector<4x32xf32>
    %64 = arith.mulf %63, %59 : vector<4x32xf32>
    %65 = arith.mulf %64, %59 : vector<4x32xf32>
    %66 = arith.addf %59, %65 : vector<4x32xf32>
    %cst_22 = arith.constant 0.797884583 : f32
    %67 = vector.broadcast %cst_22 : f32 to vector<4x32xf32>
    %68 = arith.mulf %67, %66 : vector<4x32xf32>
    %69 = math.tanh %68 : vector<4x32xf32>
    %cst_23 = arith.constant 1.000000e+00 : f32
    %70 = vector.broadcast %cst_23 : f32 to vector<4x32xf32>
    %71 = arith.addf %70, %69 : vector<4x32xf32>
    %72 = arith.mulf %61, %71 : vector<4x32xf32>
    %73 = arith.truncf %72 : vector<4x32xf32> to vector<4x32xbf16>
    %c0_24 = arith.constant 0 : index
    %c0_25 = arith.constant 0 : index
    %74 = vector.load %arg6[%c0_24, %c0_25] : memref<16x4xbf16, #tpu.memory_space<vmem>>, vector<16x4xbf16>
    %cst_26 = arith.constant dense<0.000000e+00> : vector<16x32xf32>
    %75 = tpu.matmul %74, %73, %cst_26 {dimension_numbers = #tpu.dot_dimension_numbers<[1], [0], [0], [1], [0, 0, 1, 1], [], []>} : vector<16x4xbf16>, vector<4x32xbf16>, vector<16x32xf32> -> vector<16x32xf32>
    %c0_27 = arith.constant 0 : index
    %c0_28 = arith.constant 0 : index
    %76 = vector.load %arg8[%c0_27, %c0_28] : memref<16x1xf32, #tpu.memory_space<vmem>>, vector<16x1xf32>
    %77 = vector.broadcast %76 : vector<16x1xf32> to vector<16x32xf32>
    %78 = arith.addf %75, %77 : vector<16x32xf32>
    %c0_29 = arith.constant 0 : index
    %c0_30 = arith.constant 0 : index
    %79 = vector.load %arg7[%c0_29, %c0_30] : memref<16x4xbf16, #tpu.memory_space<vmem>>, vector<16x4xbf16>
    %cst_31 = arith.constant dense<0.000000e+00> : vector<16x32xf32>
    %80 = tpu.matmul %79, %73, %cst_31 {dimension_numbers = #tpu.dot_dimension_numbers<[1], [0], [0], [1], [0, 0, 1, 1], [], []>} : vector<16x4xbf16>, vector<4x32xbf16>, vector<16x32xf32> -> vector<16x32xf32>
    %c0_32 = arith.constant 0 : index
    %c0_33 = arith.constant 0 : index
    %81 = vector.load %arg9[%c0_32, %c0_33] : memref<16x1xf32, #tpu.memory_space<vmem>>, vector<16x1xf32>
    %82 = vector.broadcast %81 : vector<16x1xf32> to vector<16x32xf32>
    %83 = arith.addf %80, %82 : vector<16x32xf32>
    %84 = vector.shape_cast %78 : vector<16x32xf32> to vector<1x16x32xf32>
    %cst_34 = arith.constant dense<0.000000e+00> : vector<1xf32>
    %85 = vector.multi_reduction <add>, %84, %cst_34 [1, 2] : vector<1x16x32xf32> to vector<1xf32>
    %86 = vector.shape_cast %85 : vector<1xf32> to vector<1x1x1xf32>
    %87 = vector.extract %86[0, 0, 0] : f32 from vector<1x1x1xf32>
    %88 = vector.broadcast %87 : f32 to vector<1x1xf32>
    %89 = vector.shape_cast %83 : vector<16x32xf32> to vector<1x16x32xf32>
    %cst_35 = arith.constant dense<0.000000e+00> : vector<1xf32>
    %90 = vector.multi_reduction <add>, %89, %cst_35 [1, 2] : vector<1x16x32xf32> to vector<1xf32>
    %91 = vector.shape_cast %90 : vector<1xf32> to vector<1x1x1xf32>
    %92 = vector.extract %91[0, 0, 0] : f32 from vector<1x1x1xf32>
    %93 = vector.broadcast %92 : f32 to vector<1x1xf32>
    %94 = arith.addf %88, %93 : vector<1x1xf32>
    %95 = arith.mulf %78, %78 : vector<16x32xf32>
    %96 = vector.shape_cast %95 : vector<16x32xf32> to vector<1x16x32xf32>
    %cst_36 = arith.constant dense<0.000000e+00> : vector<1xf32>
    %97 = vector.multi_reduction <add>, %96, %cst_36 [1, 2] : vector<1x16x32xf32> to vector<1xf32>
    %98 = vector.shape_cast %97 : vector<1xf32> to vector<1x1x1xf32>
    %99 = vector.extract %98[0, 0, 0] : f32 from vector<1x1x1xf32>
    %100 = vector.broadcast %99 : f32 to vector<1x1xf32>
    %101 = arith.mulf %83, %83 : vector<16x32xf32>
    %102 = vector.shape_cast %101 : vector<16x32xf32> to vector<1x16x32xf32>
    %cst_37 = arith.constant dense<0.000000e+00> : vector<1xf32>
    %103 = vector.multi_reduction <add>, %102, %cst_37 [1, 2] : vector<1x16x32xf32> to vector<1xf32>
    %104 = vector.shape_cast %103 : vector<1xf32> to vector<1x1x1xf32>
    %105 = vector.extract %104[0, 0, 0] : f32 from vector<1x1x1xf32>
    %106 = vector.broadcast %105 : f32 to vector<1x1xf32>
    %107 = arith.addf %100, %106 : vector<1x1xf32>
    %cst_38 = arith.constant 9.765625E-4 : f32
    %108 = vector.broadcast %cst_38 : f32 to vector<1x1xf32>
    %109 = arith.mulf %94, %108 : vector<1x1xf32>
    %cst_39 = arith.constant 9.765625E-4 : f32
    %110 = vector.broadcast %cst_39 : f32 to vector<1x1xf32>
    %111 = arith.mulf %107, %110 : vector<1x1xf32>
    %112 = arith.mulf %109, %109 : vector<1x1xf32>
    %113 = arith.subf %111, %112 : vector<1x1xf32>
    %cst_40 = arith.constant 0.000000e+00 : f32
    %114 = vector.broadcast %cst_40 : f32 to vector<1x1xf32>
    %115 = arith.maximumf %113, %114 : vector<1x1xf32>
    %cst_41 = arith.constant 9.99999974E-6 : f32
    %116 = vector.broadcast %cst_41 : f32 to vector<1x1xf32>
    %117 = arith.addf %115, %116 : vector<1x1xf32>
    %118 = math.rsqrt %117 : vector<1x1xf32>
    %119 = vector.broadcast %109 : vector<1x1xf32> to vector<16x32xf32>
    %120 = arith.subf %78, %119 : vector<16x32xf32>
    %121 = vector.broadcast %118 : vector<1x1xf32> to vector<16x32xf32>
    %122 = arith.mulf %120, %121 : vector<16x32xf32>
    %c0_42 = arith.constant 0 : index
    %c0_43 = arith.constant 0 : index
    %123 = vector.load %arg10[%c0_42, %c0_43] : memref<16x1xf32, #tpu.memory_space<vmem>>, vector<16x1xf32>
    %124 = vector.broadcast %123 : vector<16x1xf32> to vector<16x32xf32>
    %125 = arith.mulf %122, %124 : vector<16x32xf32>
    %c0_44 = arith.constant 0 : index
    %c0_45 = arith.constant 0 : index
    %126 = vector.load %arg12[%c0_44, %c0_45] : memref<16x1xf32, #tpu.memory_space<vmem>>, vector<16x1xf32>
    %127 = vector.broadcast %126 : vector<16x1xf32> to vector<16x32xf32>
    %128 = arith.addf %125, %127 : vector<16x32xf32>
    %129 = vector.broadcast %109 : vector<1x1xf32> to vector<16x32xf32>
    %130 = arith.subf %83, %129 : vector<16x32xf32>
    %131 = vector.broadcast %118 : vector<1x1xf32> to vector<16x32xf32>
    %132 = arith.mulf %130, %131 : vector<16x32xf32>
    %c0_46 = arith.constant 0 : index
    %c0_47 = arith.constant 0 : index
    %133 = vector.load %arg11[%c0_46, %c0_47] : memref<16x1xf32, #tpu.memory_space<vmem>>, vector<16x1xf32>
    %134 = vector.broadcast %133 : vector<16x1xf32> to vector<16x32xf32>
    %135 = arith.mulf %132, %134 : vector<16x32xf32>
    %c0_48 = arith.constant 0 : index
    %c0_49 = arith.constant 0 : index
    %136 = vector.load %arg13[%c0_48, %c0_49] : memref<16x1xf32, #tpu.memory_space<vmem>>, vector<16x1xf32>
    %137 = vector.broadcast %136 : vector<16x1xf32> to vector<16x32xf32>
    %138 = arith.addf %135, %137 : vector<16x32xf32>
    %c0_50 = arith.constant 0 : index
    %c0_51 = arith.constant 0 : index
    %139 = vector.load %arg14[%c0_50, %c0_51] : memref<16x1xf32, #tpu.memory_space<vmem>>, vector<16x1xf32>
    %140 = arith.negf %138 : vector<16x32xf32>
    %141 = math.exp %140 : vector<16x32xf32>
    %cst_52 = arith.constant 1.000000e+00 : f32
    %142 = vector.broadcast %cst_52 : f32 to vector<16x32xf32>
    %143 = arith.addf %142, %141 : vector<16x32xf32>
    %144 = arith.divf %142, %143 : vector<16x32xf32>
    %145 = arith.mulf %128, %144 : vector<16x32xf32>
    %146 = vector.broadcast %139 : vector<16x1xf32> to vector<16x32xf32>
    %147 = arith.mulf %146, %145 : vector<16x32xf32>
    %148 = arith.addf %1, %147 : vector<16x32xf32>
    %149 = arith.truncf %148 : vector<16x32xf32> to vector<16x32xbf16>
    %c0_53 = arith.constant 0 : index
    %c0_54 = arith.constant 0 : index
    %150 = vector.load %arg15[%c0_53, %c0_54] : memref<12x16xbf16, #tpu.memory_space<vmem>>, vector<12x16xbf16>
    %cst_55 = arith.constant dense<0.000000e+00> : vector<12x32xf32>
    %151 = tpu.matmul %150, %149, %cst_55 {dimension_numbers = #tpu.dot_dimension_numbers<[1], [0], [0], [1], [0, 0, 1, 1], [], []>} : vector<12x16xbf16>, vector<16x32xbf16>, vector<12x32xf32> -> vector<12x32xf32>
    %152 = vector.extract_strided_slice %151 {offsets = [4, 0], sizes = [4, 32], strides = [1, 1]} : vector<12x32xf32> to vector<4x32xf32>
    %153 = vector.extract_strided_slice %151 {offsets = [0, 0], sizes = [4, 32], strides = [1, 1]} : vector<12x32xf32> to vector<4x32xf32>
    %c2_i32 = arith.constant 2 : i32
    %154 = tpu.dynamic_rotate %153 by %c2_i32 dim 1 : vector<4x32xf32>, i32 -> vector<4x32xf32>
    %c2_i32_56 = arith.constant 2 : i32
    %155 = vector.broadcast %c2_i32_56 : i32 to vector<1x32xi32>
    %156 = arith.cmpi sge, %2, %155 : vector<1x32xi32>
    %cst_57 = arith.constant 0.000000e+00 : f32
    %157 = vector.shape_cast %156 : vector<1x32xi1> to vector<1x32xi1>
    %158 = vector.broadcast %157 : vector<1x32xi1> to vector<4x32xi1>
    %159 = vector.broadcast %cst_57 : f32 to vector<4x32xf32>
    %160 = arith.select %158, %154, %159 : vector<4x32xi1>, vector<4x32xf32>
    %161 = arith.addf %152, %160 : vector<4x32xf32>
    %162 = vector.extract_strided_slice %151 {offsets = [8, 0], sizes = [4, 32], strides = [1, 1]} : vector<12x32xf32> to vector<4x32xf32>
    %c30_i32 = arith.constant 30 : i32
    %163 = tpu.dynamic_rotate %162 by %c30_i32 dim 1 : vector<4x32xf32>, i32 -> vector<4x32xf32>
    %c30_i32_58 = arith.constant 30 : i32
    %164 = vector.broadcast %c30_i32_58 : i32 to vector<1x32xi32>
    %165 = arith.cmpi slt, %2, %164 : vector<1x32xi32>
    %cst_59 = arith.constant 0.000000e+00 : f32
    %166 = vector.shape_cast %165 : vector<1x32xi1> to vector<1x32xi1>
    %167 = vector.broadcast %166 : vector<1x32xi1> to vector<4x32xi1>
    %168 = vector.broadcast %cst_59 : f32 to vector<4x32xf32>
    %169 = arith.select %167, %163, %168 : vector<4x32xi1>, vector<4x32xf32>
    %170 = arith.addf %161, %169 : vector<4x32xf32>
    %c0_60 = arith.constant 0 : index
    %c0_61 = arith.constant 0 : index
    %171 = vector.load %arg16[%c0_60, %c0_61] : memref<4x1xf32, #tpu.memory_space<vmem>>, vector<4x1xf32>
    %172 = vector.broadcast %171 : vector<4x1xf32> to vector<4x32xf32>
    %173 = arith.addf %170, %172 : vector<4x32xf32>
    %c0_62 = arith.constant 0 : index
    %c0_63 = arith.constant 0 : index
    %174 = vector.load %arg17[%c0_62, %c0_63] : memref<4x1xf32, #tpu.memory_space<vmem>>, vector<4x1xf32>
    %c0_64 = arith.constant 0 : index
    %c0_65 = arith.constant 0 : index
    %175 = vector.load %arg18[%c0_64, %c0_65] : memref<4x1xf32, #tpu.memory_space<vmem>>, vector<4x1xf32>
    %176 = vector.shape_cast %173 : vector<4x32xf32> to vector<1x4x32xf32>
    %cst_66 = arith.constant dense<0.000000e+00> : vector<1xf32>
    %177 = vector.multi_reduction <add>, %176, %cst_66 [1, 2] : vector<1x4x32xf32> to vector<1xf32>
    %178 = vector.shape_cast %177 : vector<1xf32> to vector<1x1x1xf32>
    %179 = vector.extract %178[0, 0, 0] : f32 from vector<1x1x1xf32>
    %180 = vector.broadcast %179 : f32 to vector<1x1xf32>
    %181 = arith.mulf %173, %173 : vector<4x32xf32>
    %182 = vector.shape_cast %181 : vector<4x32xf32> to vector<1x4x32xf32>
    %cst_67 = arith.constant dense<0.000000e+00> : vector<1xf32>
    %183 = vector.multi_reduction <add>, %182, %cst_67 [1, 2] : vector<1x4x32xf32> to vector<1xf32>
    %184 = vector.shape_cast %183 : vector<1xf32> to vector<1x1x1xf32>
    %185 = vector.extract %184[0, 0, 0] : f32 from vector<1x1x1xf32>
    %186 = vector.broadcast %185 : f32 to vector<1x1xf32>
    %cst_68 = arith.constant 7.812500e-03 : f32
    %187 = vector.broadcast %cst_68 : f32 to vector<1x1xf32>
    %188 = arith.mulf %180, %187 : vector<1x1xf32>
    %cst_69 = arith.constant 7.812500e-03 : f32
    %189 = vector.broadcast %cst_69 : f32 to vector<1x1xf32>
    %190 = arith.mulf %186, %189 : vector<1x1xf32>
    %191 = arith.mulf %188, %188 : vector<1x1xf32>
    %192 = arith.subf %190, %191 : vector<1x1xf32>
    %cst_70 = arith.constant 0.000000e+00 : f32
    %193 = vector.broadcast %cst_70 : f32 to vector<1x1xf32>
    %194 = arith.maximumf %192, %193 : vector<1x1xf32>
    %195 = vector.broadcast %188 : vector<1x1xf32> to vector<4x32xf32>
    %196 = arith.subf %173, %195 : vector<4x32xf32>
    %cst_71 = arith.constant 9.99999974E-6 : f32
    %197 = vector.broadcast %cst_71 : f32 to vector<1x1xf32>
    %198 = arith.addf %194, %197 : vector<1x1xf32>
    %199 = math.rsqrt %198 : vector<1x1xf32>
    %200 = vector.broadcast %199 : vector<1x1xf32> to vector<4x32xf32>
    %201 = arith.mulf %196, %200 : vector<4x32xf32>
    %202 = vector.broadcast %174 : vector<4x1xf32> to vector<4x32xf32>
    %203 = arith.mulf %201, %202 : vector<4x32xf32>
    %204 = vector.broadcast %175 : vector<4x1xf32> to vector<4x32xf32>
    %205 = arith.addf %203, %204 : vector<4x32xf32>
    %cst_72 = arith.constant 5.000000e-01 : f32
    %206 = vector.broadcast %cst_72 : f32 to vector<4x32xf32>
    %207 = arith.mulf %206, %205 : vector<4x32xf32>
    %cst_73 = arith.constant 4.471500e-02 : f32
    %208 = vector.broadcast %cst_73 : f32 to vector<4x32xf32>
    %209 = arith.mulf %208, %205 : vector<4x32xf32>
    %210 = arith.mulf %209, %205 : vector<4x32xf32>
    %211 = arith.mulf %210, %205 : vector<4x32xf32>
    %212 = arith.addf %205, %211 : vector<4x32xf32>
    %cst_74 = arith.constant 0.797884583 : f32
    %213 = vector.broadcast %cst_74 : f32 to vector<4x32xf32>
    %214 = arith.mulf %213, %212 : vector<4x32xf32>
    %215 = math.tanh %214 : vector<4x32xf32>
    %cst_75 = arith.constant 1.000000e+00 : f32
    %216 = vector.broadcast %cst_75 : f32 to vector<4x32xf32>
    %217 = arith.addf %216, %215 : vector<4x32xf32>
    %218 = arith.mulf %207, %217 : vector<4x32xf32>
    %219 = arith.truncf %218 : vector<4x32xf32> to vector<4x32xbf16>
    %c0_76 = arith.constant 0 : index
    %c0_77 = arith.constant 0 : index
    %220 = vector.load %arg19[%c0_76, %c0_77] : memref<16x4xbf16, #tpu.memory_space<vmem>>, vector<16x4xbf16>
    %cst_78 = arith.constant dense<0.000000e+00> : vector<16x32xf32>
    %221 = tpu.matmul %220, %219, %cst_78 {dimension_numbers = #tpu.dot_dimension_numbers<[1], [0], [0], [1], [0, 0, 1, 1], [], []>} : vector<16x4xbf16>, vector<4x32xbf16>, vector<16x32xf32> -> vector<16x32xf32>
    %c0_79 = arith.constant 0 : index
    %c0_80 = arith.constant 0 : index
    %222 = vector.load %arg21[%c0_79, %c0_80] : memref<16x1xf32, #tpu.memory_space<vmem>>, vector<16x1xf32>
    %223 = vector.broadcast %222 : vector<16x1xf32> to vector<16x32xf32>
    %224 = arith.addf %221, %223 : vector<16x32xf32>
    %c0_81 = arith.constant 0 : index
    %c0_82 = arith.constant 0 : index
    %225 = vector.load %arg20[%c0_81, %c0_82] : memref<16x4xbf16, #tpu.memory_space<vmem>>, vector<16x4xbf16>
    %cst_83 = arith.constant dense<0.000000e+00> : vector<16x32xf32>
    %226 = tpu.matmul %225, %219, %cst_83 {dimension_numbers = #tpu.dot_dimension_numbers<[1], [0], [0], [1], [0, 0, 1, 1], [], []>} : vector<16x4xbf16>, vector<4x32xbf16>, vector<16x32xf32> -> vector<16x32xf32>
    %c0_84 = arith.constant 0 : index
    %c0_85 = arith.constant 0 : index
    %227 = vector.load %arg22[%c0_84, %c0_85] : memref<16x1xf32, #tpu.memory_space<vmem>>, vector<16x1xf32>
    %228 = vector.broadcast %227 : vector<16x1xf32> to vector<16x32xf32>
    %229 = arith.addf %226, %228 : vector<16x32xf32>
    %230 = vector.shape_cast %224 : vector<16x32xf32> to vector<1x16x32xf32>
    %cst_86 = arith.constant dense<0.000000e+00> : vector<1xf32>
    %231 = vector.multi_reduction <add>, %230, %cst_86 [1, 2] : vector<1x16x32xf32> to vector<1xf32>
    %232 = vector.shape_cast %231 : vector<1xf32> to vector<1x1x1xf32>
    %233 = vector.extract %232[0, 0, 0] : f32 from vector<1x1x1xf32>
    %234 = vector.broadcast %233 : f32 to vector<1x1xf32>
    %235 = vector.shape_cast %229 : vector<16x32xf32> to vector<1x16x32xf32>
    %cst_87 = arith.constant dense<0.000000e+00> : vector<1xf32>
    %236 = vector.multi_reduction <add>, %235, %cst_87 [1, 2] : vector<1x16x32xf32> to vector<1xf32>
    %237 = vector.shape_cast %236 : vector<1xf32> to vector<1x1x1xf32>
    %238 = vector.extract %237[0, 0, 0] : f32 from vector<1x1x1xf32>
    %239 = vector.broadcast %238 : f32 to vector<1x1xf32>
    %240 = arith.addf %234, %239 : vector<1x1xf32>
    %241 = arith.mulf %224, %224 : vector<16x32xf32>
    %242 = vector.shape_cast %241 : vector<16x32xf32> to vector<1x16x32xf32>
    %cst_88 = arith.constant dense<0.000000e+00> : vector<1xf32>
    %243 = vector.multi_reduction <add>, %242, %cst_88 [1, 2] : vector<1x16x32xf32> to vector<1xf32>
    %244 = vector.shape_cast %243 : vector<1xf32> to vector<1x1x1xf32>
    %245 = vector.extract %244[0, 0, 0] : f32 from vector<1x1x1xf32>
    %246 = vector.broadcast %245 : f32 to vector<1x1xf32>
    %247 = arith.mulf %229, %229 : vector<16x32xf32>
    %248 = vector.shape_cast %247 : vector<16x32xf32> to vector<1x16x32xf32>
    %cst_89 = arith.constant dense<0.000000e+00> : vector<1xf32>
    %249 = vector.multi_reduction <add>, %248, %cst_89 [1, 2] : vector<1x16x32xf32> to vector<1xf32>
    %250 = vector.shape_cast %249 : vector<1xf32> to vector<1x1x1xf32>
    %251 = vector.extract %250[0, 0, 0] : f32 from vector<1x1x1xf32>
    %252 = vector.broadcast %251 : f32 to vector<1x1xf32>
    %253 = arith.addf %246, %252 : vector<1x1xf32>
    %cst_90 = arith.constant 9.765625E-4 : f32
    %254 = vector.broadcast %cst_90 : f32 to vector<1x1xf32>
    %255 = arith.mulf %240, %254 : vector<1x1xf32>
    %cst_91 = arith.constant 9.765625E-4 : f32
    %256 = vector.broadcast %cst_91 : f32 to vector<1x1xf32>
    %257 = arith.mulf %253, %256 : vector<1x1xf32>
    %258 = arith.mulf %255, %255 : vector<1x1xf32>
    %259 = arith.subf %257, %258 : vector<1x1xf32>
    %cst_92 = arith.constant 0.000000e+00 : f32
    %260 = vector.broadcast %cst_92 : f32 to vector<1x1xf32>
    %261 = arith.maximumf %259, %260 : vector<1x1xf32>
    %cst_93 = arith.constant 9.99999974E-6 : f32
    %262 = vector.broadcast %cst_93 : f32 to vector<1x1xf32>
    %263 = arith.addf %261, %262 : vector<1x1xf32>
    %264 = math.rsqrt %263 : vector<1x1xf32>
    %265 = vector.broadcast %255 : vector<1x1xf32> to vector<16x32xf32>
    %266 = arith.subf %224, %265 : vector<16x32xf32>
    %267 = vector.broadcast %264 : vector<1x1xf32> to vector<16x32xf32>
    %268 = arith.mulf %266, %267 : vector<16x32xf32>
    %c0_94 = arith.constant 0 : index
    %c0_95 = arith.constant 0 : index
    %269 = vector.load %arg23[%c0_94, %c0_95] : memref<16x1xf32, #tpu.memory_space<vmem>>, vector<16x1xf32>
    %270 = vector.broadcast %269 : vector<16x1xf32> to vector<16x32xf32>
    %271 = arith.mulf %268, %270 : vector<16x32xf32>
    %c0_96 = arith.constant 0 : index
    %c0_97 = arith.constant 0 : index
    %272 = vector.load %arg25[%c0_96, %c0_97] : memref<16x1xf32, #tpu.memory_space<vmem>>, vector<16x1xf32>
    %273 = vector.broadcast %272 : vector<16x1xf32> to vector<16x32xf32>
    %274 = arith.addf %271, %273 : vector<16x32xf32>
    %275 = vector.broadcast %255 : vector<1x1xf32> to vector<16x32xf32>
    %276 = arith.subf %229, %275 : vector<16x32xf32>
    %277 = vector.broadcast %264 : vector<1x1xf32> to vector<16x32xf32>
    %278 = arith.mulf %276, %277 : vector<16x32xf32>
    %c0_98 = arith.constant 0 : index
    %c0_99 = arith.constant 0 : index
    %279 = vector.load %arg24[%c0_98, %c0_99] : memref<16x1xf32, #tpu.memory_space<vmem>>, vector<16x1xf32>
    %280 = vector.broadcast %279 : vector<16x1xf32> to vector<16x32xf32>
    %281 = arith.mulf %278, %280 : vector<16x32xf32>
    %c0_100 = arith.constant 0 : index
    %c0_101 = arith.constant 0 : index
    %282 = vector.load %arg26[%c0_100, %c0_101] : memref<16x1xf32, #tpu.memory_space<vmem>>, vector<16x1xf32>
    %283 = vector.broadcast %282 : vector<16x1xf32> to vector<16x32xf32>
    %284 = arith.addf %281, %283 : vector<16x32xf32>
    %c0_102 = arith.constant 0 : index
    %c0_103 = arith.constant 0 : index
    %285 = vector.load %arg27[%c0_102, %c0_103] : memref<16x1xf32, #tpu.memory_space<vmem>>, vector<16x1xf32>
    %286 = arith.negf %284 : vector<16x32xf32>
    %287 = math.exp %286 : vector<16x32xf32>
    %cst_104 = arith.constant 1.000000e+00 : f32
    %288 = vector.broadcast %cst_104 : f32 to vector<16x32xf32>
    %289 = arith.addf %288, %287 : vector<16x32xf32>
    %290 = arith.divf %288, %289 : vector<16x32xf32>
    %291 = arith.mulf %274, %290 : vector<16x32xf32>
    %292 = vector.broadcast %285 : vector<16x1xf32> to vector<16x32xf32>
    %293 = arith.mulf %292, %291 : vector<16x32xf32>
    %294 = arith.addf %148, %293 : vector<16x32xf32>
    %c0_105 = arith.constant 0 : index
    %c0_106 = arith.constant 0 : index
    %c0_107 = arith.constant 0 : index
    %295 = vector.load %arg28[%c0_105, %c0_106, %c0_107] : memref<1x16x32xf32, #tpu.memory_space<vmem>>, vector<1x16x32xf32>
    %296 = vector.shape_cast %295 : vector<1x16x32xf32> to vector<16x32xf32>
    %297 = vector.shape_cast %294 : vector<16x32xf32> to vector<1x16x32xf32>
    tpu.vector_store %arg28[%c0_105, %c0_106, %c0_107], %297 {strides = array<i32>} : memref<1x16x32xf32, #tpu.memory_space<vmem>>, vector<1x16x32xf32>,
    return
  }
  func.func @transform_0(%arg0: i32) -> (i32, i32, i32) {
    %c0_i32 = arith.constant 0 : i32
    %c0_i32_0 = arith.constant 0 : i32
    %c0_i32_1 = arith.constant 0 : i32
    return %arg0, %c0_i32, %c0_i32_0 : i32, i32, i32
  }
  func.func @transform_1(%arg0: i32) -> (i32, i32) {
    %c0_i32 = arith.constant 0 : i32
    %c0_i32_0 = arith.constant 0 : i32
    %c0_i32_1 = arith.constant 0 : i32
    return %c0_i32, %c0_i32_0 : i32, i32
  }
  func.func @transform_2(%arg0: i32) -> (i32, i32) {
    %c0_i32 = arith.constant 0 : i32
    %c0_i32_0 = arith.constant 0 : i32
    %c0_i32_1 = arith.constant 0 : i32
    return %c0_i32, %c0_i32_0 : i32, i32
  }
  func.func @transform_3(%arg0: i32) -> (i32, i32) {
    %c0_i32 = arith.constant 0 : i32
    %c0_i32_0 = arith.constant 0 : i32
    %c0_i32_1 = arith.constant 0 : i32
    return %c0_i32, %c0_i32_0 : i32, i32
  }
  func.func @transform_4(%arg0: i32) -> (i32, i32) {
    %c0_i32 = arith.constant 0 : i32
    %c0_i32_0 = arith.constant 0 : i32
    %c0_i32_1 = arith.constant 0 : i32
    return %c0_i32, %c0_i32_0 : i32, i32
  }
  func.func @transform_5(%arg0: i32) -> (i32, i32) {
    %c0_i32 = arith.constant 0 : i32
    %c0_i32_0 = arith.constant 0 : i32
    %c0_i32_1 = arith.constant 0 : i32
    return %c0_i32, %c0_i32_0 : i32, i32
  }
  func.func @transform_6(%arg0: i32) -> (i32, i32) {
    %c0_i32 = arith.constant 0 : i32
    %c0_i32_0 = arith.constant 0 : i32
    %c0_i32_1 = arith.constant 0 : i32
    return %c0_i32, %c0_i32_0 : i32, i32
  }
  func.func @transform_7(%arg0: i32) -> (i32, i32) {
    %c0_i32 = arith.constant 0 : i32
    %c0_i32_0 = arith.constant 0 : i32
    %c0_i32_1 = arith.constant 0 : i32
    return %c0_i32, %c0_i32_0 : i32, i32
  }
  func.func @transform_8(%arg0: i32) -> (i32, i32) {
    %c0_i32 = arith.constant 0 : i32
    %c0_i32_0 = arith.constant 0 : i32
    %c0_i32_1 = arith.constant 0 : i32
    return %c0_i32, %c0_i32_0 : i32, i32
  }
  func.func @transform_9(%arg0: i32) -> (i32, i32) {
    %c0_i32 = arith.constant 0 : i32
    %c0_i32_0 = arith.constant 0 : i32
    %c0_i32_1 = arith.constant 0 : i32
    return %c0_i32, %c0_i32_0 : i32, i32
  }
  func.func @transform_10(%arg0: i32) -> (i32, i32) {
    %c0_i32 = arith.constant 0 : i32
    %c0_i32_0 = arith.constant 0 : i32
    %c0_i32_1 = arith.constant 0 : i32
    return %c0_i32, %c0_i32_0 : i32, i32
  }
  func.func @transform_11(%arg0: i32) -> (i32, i32) {
    %c0_i32 = arith.constant 0 : i32
    %c0_i32_0 = arith.constant 0 : i32
    %c0_i32_1 = arith.constant 0 : i32
    return %c0_i32, %c0_i32_0 : i32, i32
  }
  func.func @transform_12(%arg0: i32) -> (i32, i32) {
    %c0_i32 = arith.constant 0 : i32
    %c0_i32_0 = arith.constant 0 : i32
    %c0_i32_1 = arith.constant 0 : i32
    return %c0_i32, %c0_i32_0 : i32, i32
  }
  func.func @transform_13(%arg0: i32) -> (i32, i32) {
    %c0_i32 = arith.constant 0 : i32
    %c0_i32_0 = arith.constant 0 : i32
    %c0_i32_1 = arith.constant 0 : i32
    return %c0_i32, %c0_i32_0 : i32, i32
  }
  func.func @transform_14(%arg0: i32) -> (i32, i32) {
    %c0_i32 = arith.constant 0 : i32
    %c0_i32_0 = arith.constant 0 : i32
    %c0_i32_1 = arith.constant 0 : i32
    return %c0_i32, %c0_i32_0 : i32, i32
  }
  func.func @transform_15(%arg0: i32) -> (i32, i32) {
    %c0_i32 = arith.constant 0 : i32
    %c0_i32_0 = arith.constant 0 : i32
    %c0_i32_1 = arith.constant 0 : i32
    return %c0_i32, %c0_i32_0 : i32, i32
  }
  func.func @transform_16(%arg0: i32) -> (i32, i32) {
    %c0_i32 = arith.constant 0 : i32
    %c0_i32_0 = arith.constant 0 : i32
    %c0_i32_1 = arith.constant 0 : i32
    return %c0_i32, %c0_i32_0 : i32, i32
  }
  func.func @transform_17(%arg0: i32) -> (i32, i32) {
    %c0_i32 = arith.constant 0 : i32
    %c0_i32_0 = arith.constant 0 : i32
    %c0_i32_1 = arith.constant 0 : i32
    return %c0_i32, %c0_i32_0 : i32, i32
  }
  func.func @transform_18(%arg0: i32) -> (i32, i32) {
    %c0_i32 = arith.constant 0 : i32
    %c0_i32_0 = arith.constant 0 : i32
    %c0_i32_1 = arith.constant 0 : i32
    return %c0_i32, %c0_i32_0 : i32, i32
  }
  func.func @transform_19(%arg0: i32) -> (i32, i32) {
    %c0_i32 = arith.constant 0 : i32
    %c0_i32_0 = arith.constant 0 : i32
    %c0_i32_1 = arith.constant 0 : i32
    return %c0_i32, %c0_i32_0 : i32, i32
  }
  func.func @transform_20(%arg0: i32) -> (i32, i32) {
    %c0_i32 = arith.constant 0 : i32
    %c0_i32_0 = arith.constant 0 : i32
    %c0_i32_1 = arith.constant 0 : i32
    return %c0_i32, %c0_i32_0 : i32, i32
  }
  func.func @transform_21(%arg0: i32) -> (i32, i32) {
    %c0_i32 = arith.constant 0 : i32
    %c0_i32_0 = arith.constant 0 : i32
    %c0_i32_1 = arith.constant 0 : i32
    return %c0_i32, %c0_i32_0 : i32, i32
  }
  func.func @transform_22(%arg0: i32) -> (i32, i32) {
    %c0_i32 = arith.constant 0 : i32
    %c0_i32_0 = arith.constant 0 : i32
    %c0_i32_1 = arith.constant 0 : i32
    return %c0_i32, %c0_i32_0 : i32, i32
  }
  func.func @transform_23(%arg0: i32) -> (i32, i32) {
    %c0_i32 = arith.constant 0 : i32
    %c0_i32_0 = arith.constant 0 : i32
    %c0_i32_1 = arith.constant 0 : i32
    return %c0_i32, %c0_i32_0 : i32, i32
  }
  func.func @transform_24(%arg0: i32) -> (i32, i32) {
    %c0_i32 = arith.constant 0 : i32
    %c0_i32_0 = arith.constant 0 : i32
    %c0_i32_1 = arith.constant 0 : i32
    return %c0_i32, %c0_i32_0 : i32, i32
  }
  func.func @transform_25(%arg0: i32) -> (i32, i32) {
    %c0_i32 = arith.constant 0 : i32
    %c0_i32_0 = arith.constant 0 : i32
    %c0_i32_1 = arith.constant 0 : i32
    return %c0_i32, %c0_i32_0 : i32, i32
  }
  func.func @transform_26(%arg0: i32) -> (i32, i32) {
    %c0_i32 = arith.constant 0 : i32
    %c0_i32_0 = arith.constant 0 : i32
    %c0_i32_1 = arith.constant 0 : i32
    return %c0_i32, %c0_i32_0 : i32, i32
  }
  func.func @transform_27(%arg0: i32) -> (i32, i32, i32) {
    %c0_i32 = arith.constant 0 : i32
    %c0_i32_0 = arith.constant 0 : i32
    %c0_i32_1 = arith.constant 0 : i32
    return %arg0, %c0_i32, %c0_i32_0 : i32, i32, i32
  }
}

</mosaic_0001>

<llo_original>
// kernel: tpu_custom_call.1
$region0: #{tpu_custom_call.1}
  #allocation0 [shape = 'u32[]', space=smem, size = 0x4, offset = 0x4, fixed_abs, tag = 'smem constant byte address 0x4 - core index']
  #allocation1 [shape = 'u32[144,128]{1,0:T(1,128)}', space=vmem, size = 0x12000, scoped, tag = 'internal scratch']
  %s0 = inlined_call_operand.vmem [shape: f32[2,16,32], index: 0, kind: input, shape index: {}]
  %s1 = inlined_call_operand.vmem [shape: bf16[12,16], index: 1, kind: input, shape index: {}]
  %s2 = inlined_call_operand.vmem [shape: f32[4,1], index: 2, kind: input, shape index: {}]
  %s3 = inlined_call_operand.vmem [shape: f32[4,1], index: 3, kind: input, shape index: {}]
  %s4 = inlined_call_operand.vmem [shape: f32[4,1], index: 4, kind: input, shape index: {}]
  %s5 = inlined_call_operand.vmem [shape: bf16[16,4], index: 5, kind: input, shape index: {}]
  %s6 = inlined_call_operand.vmem [shape: bf16[16,4], index: 6, kind: input, shape index: {}]
  %s7 = inlined_call_operand.vmem [shape: f32[16,1], index: 7, kind: input, shape index: {}]
  %s8 = inlined_call_operand.vmem [shape: f32[16,1], index: 8, kind: input, shape index: {}]
  %s9 = inlined_call_operand.vmem [shape: f32[16,1], index: 9, kind: input, shape index: {}]
  %s10 = inlined_call_operand.vmem [shape: f32[16,1], index: 10, kind: input, shape index: {}]
  %s11 = inlined_call_operand.vmem [shape: f32[16,1], index: 11, kind: input, shape index: {}]
  %s12 = inlined_call_operand.vmem [shape: f32[16,1], index: 12, kind: input, shape index: {}]
  %s13 = inlined_call_operand.vmem [shape: f32[16,1], index: 13, kind: input, shape index: {}]
  %s14 = inlined_call_operand.vmem [shape: bf16[12,16], index: 14, kind: input, shape index: {}]
  %s15 = inlined_call_operand.vmem [shape: f32[4,1], index: 15, kind: input, shape index: {}]
  %s16 = inlined_call_operand.vmem [shape: f32[4,1], index: 16, kind: input, shape index: {}]
  %s17 = inlined_call_operand.vmem [shape: f32[4,1], index: 17, kind: input, shape index: {}]
  %s18 = inlined_call_operand.vmem [shape: bf16[16,4], index: 18, kind: input, shape index: {}]
  %s19 = inlined_call_operand.vmem [shape: bf16[16,4], index: 19, kind: input, shape index: {}]
  %s20 = inlined_call_operand.vmem [shape: f32[16,1], index: 20, kind: input, shape index: {}]
  %s21 = inlined_call_operand.vmem [shape: f32[16,1], index: 21, kind: input, shape index: {}]
  %s22 = inlined_call_operand.vmem [shape: f32[16,1], index: 22, kind: input, shape index: {}]
  %s23 = inlined_call_operand.vmem [shape: f32[16,1], index: 23, kind: input, shape index: {}]
  %s24 = inlined_call_operand.vmem [shape: f32[16,1], index: 24, kind: input, shape index: {}]
  %s25 = inlined_call_operand.vmem [shape: f32[16,1], index: 25, kind: input, shape index: {}]
  %s26 = inlined_call_operand.vmem [shape: f32[16,1], index: 26, kind: input, shape index: {}]
  %s27 = inlined_call_operand.hbm [shape: f32[2,16,32], index: 27, kind: output, shape index: {}]
  %s28 = sld [smem:[#allocation0]]
  $region141: #{tpu_custom_call.1} parent=0
    _
  %s30 = ssub.s32 1, %s28
  %s31 = scalar_select 0, %s30, %s28
  $region1: #{tpu_custom_call.1} parent=0
    #allocation2 [shape = 'u8[16384]{0}', space=vmem, size = 0x4000, scoped, tag = 'output window, operand 0']
    #allocation3 [shape = 's32[2]{0}', space=sflag, size = 0x8, scoped, tag = 'scoped memory for tpu_custom_call.1']
    %32 = vsyncpa [#allocation3], 0
    %s33 = scalar_lea.sflag [#allocation3], 1
    %34 = vsyncpa %s33, 0
    loop: start=0, step=1, limit=4
    $region2: #{tpu_custom_call.1} parent=1 // loop_pre_header
      _
    $region3: #{tpu_custom_call.1} parent=1 // loop_header
      %s36 = sphi 0, %s40
      %p37 = scmp.ge.s32.totalorder %s36, 4
      %s46 = sphi 0, %s48
      %s49 = sphi 0, %s46
      %s50 = sphi 0, %s49
      %s66 = sphi 0, %s50
      %s70 = sphi 0, %s70
      %s72 = sphi 0, %s70
      %s73 = sphi 0, %s72
      %s87 = sphi 0, %s73
      %s91 = sphi 0, %s91
      %s93 = sphi 0, %s91
      %s94 = sphi 0, %s93
      %s108 = sphi 0, %s94
      %s112 = sphi 0, %s112
      %s114 = sphi 0, %s112
      %s115 = sphi 0, %s114
      %s129 = sphi 0, %s115
      %s133 = sphi 0, %s133
      %s135 = sphi 0, %s133
      %s136 = sphi 0, %s135
      %s150 = sphi 0, %s136
      %s154 = sphi 0, %s154
      %s156 = sphi 0, %s154
      %s157 = sphi 0, %s156
      %s171 = sphi 0, %s157
      %s175 = sphi 0, %s175
      %s177 = sphi 0, %s175
      %s178 = sphi 0, %s177
      %s192 = sphi 0, %s178
      %s196 = sphi 0, %s196
      %s198 = sphi 0, %s196
      %s199 = sphi 0, %s198
      %s213 = sphi 0, %s199
      %s217 = sphi 0, %s217
      %s219 = sphi 0, %s217
      %s220 = sphi 0, %s219
      %s234 = sphi 0, %s220
      %s238 = sphi 0, %s238
      %s240 = sphi 0, %s238
      %s241 = sphi 0, %s240
      %s255 = sphi 0, %s241
      %s259 = sphi 0, %s259
      %s261 = sphi 0, %s259
      %s262 = sphi 0, %s261
      %s276 = sphi 0, %s262
      %s280 = sphi 0, %s280
      %s282 = sphi 0, %s280
      %s283 = sphi 0, %s282
      %s297 = sphi 0, %s283
      %s301 = sphi 0, %s301
      %s303 = sphi 0, %s301
      %s304 = sphi 0, %s303
      %s318 = sphi 0, %s304
      %s322 = sphi 0, %s322
      %s324 = sphi 0, %s322
      %s325 = sphi 0, %s324
      %s339 = sphi 0, %s325
      %s343 = sphi 0, %s343
      %s345 = sphi 0, %s343
      %s346 = sphi 0, %s345
      %s360 = sphi 0, %s346
      %s364 = sphi 0, %s364
      %s366 = sphi 0, %s364
      %s367 = sphi 0, %s366
      %s381 = sphi 0, %s367
      %s385 = sphi 0, %s385
      %s387 = sphi 0, %s385
      %s388 = sphi 0, %s387
      %s402 = sphi 0, %s388
      %s406 = sphi 0, %s406
      %s408 = sphi 0, %s406
      %s409 = sphi 0, %s408
      %s423 = sphi 0, %s409
      %s427 = sphi 0, %s427
      %s429 = sphi 0, %s427
      %s430 = sphi 0, %s429
      %s444 = sphi 0, %s430
      %s448 = sphi 0, %s448
      %s450 = sphi 0, %s448
      %s451 = sphi 0, %s450
      %s465 = sphi 0, %s451
      %s469 = sphi 0, %s469
      %s471 = sphi 0, %s469
      %s472 = sphi 0, %s471
      %s486 = sphi 0, %s472
      %s490 = sphi 0, %s490
      %s492 = sphi 0, %s490
      %s493 = sphi 0, %s492
      %s507 = sphi 0, %s493
      %s511 = sphi 0, %s511
      %s513 = sphi 0, %s511
      %s514 = sphi 0, %s513
      %s528 = sphi 0, %s514
      %s532 = sphi 0, %s532
      %s534 = sphi 0, %s532
      %s535 = sphi 0, %s534
      %s549 = sphi 0, %s535
      %s553 = sphi 0, %s553
      %s555 = sphi 0, %s553
      %s556 = sphi 0, %s555
      %s570 = sphi 0, %s556
      %s574 = sphi 0, %s574
      %s576 = sphi 0, %s574
      %s577 = sphi 0, %s576
      %s591 = sphi 0, %s577
      %s595 = sphi 0, %s595
      %s597 = sphi 0, %s595
      %s598 = sphi 0, %s597
      %s612 = sphi 0, %s598
      %s618 = sphi 0, %s620
      %s621 = sphi 0, %s618
      %s622 = sphi 0, %s621
      %s638 = sphi 0, %s622
    $region4: #{tpu_custom_call.1} parent=1 // loop_header_branch
      %39 = sbr.rel (%p37) target = $region8
    $region5: #{tpu_custom_call.1} parent=1 // loop_body
      %s41 = ssub.s32 %s36, 1
      %s42 = ssub.s32 %s36, 2
      %s43 = sadd.s32 %s36, 1
      %s44 = ssub.s32 %s36, %s43
      %p45 = scmp.eq.s32.totalorder %s44, 0
      %s47 = sadd.s32 %s46, 1
      %s48 = scalar_select %p45, %s46, %s47
      %p51 = pneg %p45
      %p52 = scmp.eq.s32.totalorder %s36, 1
      %p53 = por %p51, %p52
      %p54 = scmp.ne.s32.totalorder %s46, %s49
      %p55 = scmp.eq.s32.totalorder %s36, 0
      %p56 = por %p54, %p55
      %p57 = scmp.ne.s32.totalorder %s46, %s49
      %p58 = scmp.eq.s32.totalorder %s41, 1
      %p59 = por %p57, %p58
      %p60 = scmp.ne.s32.totalorder %s49, %s50
      %p61 = scmp.eq.s32.totalorder %s41, 0
      %p62 = por %p60, %p61
      %p63 = scmp.ne.s32.totalorder %s49, %s50
      %p64 = scmp.eq.s32.totalorder %s42, 1
      %p65 = por %p63, %p64
      %p67 = scmp.ne.s32.totalorder %s50, %s66
      %p68 = scmp.eq.s32.totalorder %s42, 0
      %p69 = por %p67, %p68
      %s71 = sadd.s32 %s70, 1
      %p74 = scmp.eq.s32.totalorder %s36, 1
      %p75 = scmp.ne.s32.totalorder %s70, %s72
      %p76 = scmp.eq.s32.totalorder %s36, 0
      %p77 = por %p75, %p76
      %p78 = scmp.ne.s32.totalorder %s70, %s72
      %p79 = scmp.eq.s32.totalorder %s41, 1
      %p80 = por %p78, %p79
      %p81 = scmp.ne.s32.totalorder %s72, %s73
      %p82 = scmp.eq.s32.totalorder %s41, 0
      %p83 = por %p81, %p82
      %p84 = scmp.ne.s32.totalorder %s72, %s73
      %p85 = scmp.eq.s32.totalorder %s42, 1
      %p86 = por %p84, %p85
      %p88 = scmp.ne.s32.totalorder %s73, %s87
      %p89 = scmp.eq.s32.totalorder %s42, 0
      %p90 = por %p88, %p89
      %s92 = sadd.s32 %s91, 1
      %p95 = scmp.eq.s32.totalorder %s36, 1
      %p96 = scmp.ne.s32.totalorder %s91, %s93
      %p97 = scmp.eq.s32.totalorder %s36, 0
      %p98 = por %p96, %p97
      %p99 = scmp.ne.s32.totalorder %s91, %s93
      %p100 = scmp.eq.s32.totalorder %s41, 1
      %p101 = por %p99, %p100
      %p102 = scmp.ne.s32.totalorder %s93, %s94
      %p103 = scmp.eq.s32.totalorder %s41, 0
      %p104 = por %p102, %p103
      %p105 = scmp.ne.s32.totalorder %s93, %s94
      %p106 = scmp.eq.s32.totalorder %s42, 1
      %p107 = por %p105, %p106
      %p109 = scmp.ne.s32.totalorder %s94, %s108
      %p110 = scmp.eq.s32.totalorder %s42, 0
      %p111 = por %p109, %p110
      %s113 = sadd.s32 %s112, 1
      %p116 = scmp.eq.s32.totalorder %s36, 1
      %p117 = scmp.ne.s32.totalorder %s112, %s114
      %p118 = scmp.eq.s32.totalorder %s36, 0
      %p119 = por %p117, %p118
      %p120 = scmp.ne.s32.totalorder %s112, %s114
      %p121 = scmp.eq.s32.totalorder %s41, 1
      %p122 = por %p120, %p121
      %p123 = scmp.ne.s32.totalorder %s114, %s115
      %p124 = scmp.eq.s32.totalorder %s41, 0
      %p125 = por %p123, %p124
      %p126 = scmp.ne.s32.totalorder %s114, %s115
      %p127 = scmp.eq.s32.totalorder %s42, 1
      %p128 = por %p126, %p127
      %p130 = scmp.ne.s32.totalorder %s115, %s129
      %p131 = scmp.eq.s32.totalorder %s42, 0
      %p132 = por %p130, %p131
      %s134 = sadd.s32 %s133, 1
      %p137 = scmp.eq.s32.totalorder %s36, 1
      %p138 = scmp.ne.s32.totalorder %s133, %s135
      %p139 = scmp.eq.s32.totalorder %s36, 0
      %p140 = por %p138, %p139
      %p141 = scmp.ne.s32.totalorder %s133, %s135
      %p142 = scmp.eq.s32.totalorder %s41, 1
      %p143 = por %p141, %p142
      %p144 = scmp.ne.s32.totalorder %s135, %s136
      %p145 = scmp.eq.s32.totalorder %s41, 0
      %p146 = por %p144, %p145
      %p147 = scmp.ne.s32.totalorder %s135, %s136
      %p148 = scmp.eq.s32.totalorder %s42, 1
      %p149 = por %p147, %p148
      %p151 = scmp.ne.s32.totalorder %s136, %s150
      %p152 = scmp.eq.s32.totalorder %s42, 0
      %p153 = por %p151, %p152
      %s155 = sadd.s32 %s154, 1
      %p158 = scmp.eq.s32.totalorder %s36, 1
      %p159 = scmp.ne.s32.totalorder %s154, %s156
      %p160 = scmp.eq.s32.totalorder %s36, 0
      %p161 = por %p159, %p160
      %p162 = scmp.ne.s32.totalorder %s154, %s156
      %p163 = scmp.eq.s32.totalorder %s41, 1
      %p164 = por %p162, %p163
      %p165 = scmp.ne.s32.totalorder %s156, %s157
      %p166 = scmp.eq.s32.totalorder %s41, 0
      %p167 = por %p165, %p166
      %p168 = scmp.ne.s32.totalorder %s156, %s157
      %p169 = scmp.eq.s32.totalorder %s42, 1
      %p170 = por %p168, %p169
      %p172 = scmp.ne.s32.totalorder %s157, %s171
      %p173 = scmp.eq.s32.totalorder %s42, 0
      %p174 = por %p172, %p173
      %s176 = sadd.s32 %s175, 1
      %p179 = scmp.eq.s32.totalorder %s36, 1
      %p180 = scmp.ne.s32.totalorder %s175, %s177
      %p181 = scmp.eq.s32.totalorder %s36, 0
      %p182 = por %p180, %p181
      %p183 = scmp.ne.s32.totalorder %s175, %s177
      %p184 = scmp.eq.s32.totalorder %s41, 1
      %p185 = por %p183, %p184
      %p186 = scmp.ne.s32.totalorder %s177, %s178
      %p187 = scmp.eq.s32.totalorder %s41, 0
      %p188 = por %p186, %p187
      %p189 = scmp.ne.s32.totalorder %s177, %s178
      %p190 = scmp.eq.s32.totalorder %s42, 1
      %p191 = por %p189, %p190
      %p193 = scmp.ne.s32.totalorder %s178, %s192
      %p194 = scmp.eq.s32.totalorder %s42, 0
      %p195 = por %p193, %p194
      %s197 = sadd.s32 %s196, 1
      %p200 = scmp.eq.s32.totalorder %s36, 1
      %p201 = scmp.ne.s32.totalorder %s196, %s198
      %p202 = scmp.eq.s32.totalorder %s36, 0
      %p203 = por %p201, %p202
      %p204 = scmp.ne.s32.totalorder %s196, %s198
      %p205 = scmp.eq.s32.totalorder %s41, 1
      %p206 = por %p204, %p205
      %p207 = scmp.ne.s32.totalorder %s198, %s199
      %p208 = scmp.eq.s32.totalorder %s41, 0
      %p209 = por %p207, %p208
      %p210 = scmp.ne.s32.totalorder %s198, %s199
      %p211 = scmp.eq.s32.totalorder %s42, 1
      %p212 = por %p210, %p211
      %p214 = scmp.ne.s32.totalorder %s199, %s213
      %p215 = scmp.eq.s32.totalorder %s42, 0
      %p216 = por %p214, %p215
      %s218 = sadd.s32 %s217, 1
      %p221 = scmp.eq.s32.totalorder %s36, 1
      %p222 = scmp.ne.s32.totalorder %s217, %s219
      %p223 = scmp.eq.s32.totalorder %s36, 0
      %p224 = por %p222, %p223
      %p225 = scmp.ne.s32.totalorder %s217, %s219
      %p226 = scmp.eq.s32.totalorder %s41, 1
      %p227 = por %p225, %p226
      %p228 = scmp.ne.s32.totalorder %s219, %s220
      %p229 = scmp.eq.s32.totalorder %s41, 0
      %p230 = por %p228, %p229
      %p231 = scmp.ne.s32.totalorder %s219, %s220
      %p232 = scmp.eq.s32.totalorder %s42, 1
      %p233 = por %p231, %p232
      %p235 = scmp.ne.s32.totalorder %s220, %s234
      %p236 = scmp.eq.s32.totalorder %s42, 0
      %p237 = por %p235, %p236
      %s239 = sadd.s32 %s238, 1
      %p242 = scmp.eq.s32.totalorder %s36, 1
      %p243 = scmp.ne.s32.totalorder %s238, %s240
      %p244 = scmp.eq.s32.totalorder %s36, 0
      %p245 = por %p243, %p244
      %p246 = scmp.ne.s32.totalorder %s238, %s240
      %p247 = scmp.eq.s32.totalorder %s41, 1
      %p248 = por %p246, %p247
      %p249 = scmp.ne.s32.totalorder %s240, %s241
      %p250 = scmp.eq.s32.totalorder %s41, 0
      %p251 = por %p249, %p250
      %p252 = scmp.ne.s32.totalorder %s240, %s241
      %p253 = scmp.eq.s32.totalorder %s42, 1
      %p254 = por %p252, %p253
      %p256 = scmp.ne.s32.totalorder %s241, %s255
      %p257 = scmp.eq.s32.totalorder %s42, 0
      %p258 = por %p256, %p257
      %s260 = sadd.s32 %s259, 1
      %p263 = scmp.eq.s32.totalorder %s36, 1
      %p264 = scmp.ne.s32.totalorder %s259, %s261
      %p265 = scmp.eq.s32.totalorder %s36, 0
      %p266 = por %p264, %p265
      %p267 = scmp.ne.s32.totalorder %s259, %s261
      %p268 = scmp.eq.s32.totalorder %s41, 1
      %p269 = por %p267, %p268
      %p270 = scmp.ne.s32.totalorder %s261, %s262
      %p271 = scmp.eq.s32.totalorder %s41, 0
      %p272 = por %p270, %p271
      %p273 = scmp.ne.s32.totalorder %s261, %s262
      %p274 = scmp.eq.s32.totalorder %s42, 1
      %p275 = por %p273, %p274
      %p277 = scmp.ne.s32.totalorder %s262, %s276
      %p278 = scmp.eq.s32.totalorder %s42, 0
      %p279 = por %p277, %p278
      %s281 = sadd.s32 %s280, 1
      %p284 = scmp.eq.s32.totalorder %s36, 1
      %p285 = scmp.ne.s32.totalorder %s280, %s282
      %p286 = scmp.eq.s32.totalorder %s36, 0
      %p287 = por %p285, %p286
      %p288 = scmp.ne.s32.totalorder %s280, %s282
      %p289 = scmp.eq.s32.totalorder %s41, 1
      %p290 = por %p288, %p289
      %p291 = scmp.ne.s32.totalorder %s282, %s283
      %p292 = scmp.eq.s32.totalorder %s41, 0
      %p293 = por %p291, %p292
      %p294 = scmp.ne.s32.totalorder %s282, %s283
      %p295 = scmp.eq.s32.totalorder %s42, 1
      %p296 = por %p294, %p295
      %p298 = scmp.ne.s32.totalorder %s283, %s297
      %p299 = scmp.eq.s32.totalorder %s42, 0
      %p300 = por %p298, %p299
      %s302 = sadd.s32 %s301, 1
      %p305 = scmp.eq.s32.totalorder %s36, 1
      %p306 = scmp.ne.s32.totalorder %s301, %s303
      %p307 = scmp.eq.s32.totalorder %s36, 0
      %p308 = por %p306, %p307
      %p309 = scmp.ne.s32.totalorder %s301, %s303
      %p310 = scmp.eq.s32.totalorder %s41, 1
      %p311 = por %p309, %p310
      %p312 = scmp.ne.s32.totalorder %s303, %s304
      %p313 = scmp.eq.s32.totalorder %s41, 0
      %p314 = por %p312, %p313
      %p315 = scmp.ne.s32.totalorder %s303, %s304
      %p316 = scmp.eq.s32.totalorder %s42, 1
      %p317 = por %p315, %p316
      %p319 = scmp.ne.s32.totalorder %s304, %s318
      %p320 = scmp.eq.s32.totalorder %s42, 0
      %p321 = por %p319, %p320
      %s323 = sadd.s32 %s322, 1
      %p326 = scmp.eq.s32.totalorder %s36, 1
      %p327 = scmp.ne.s32.totalorder %s322, %s324
      %p328 = scmp.eq.s32.totalorder %s36, 0
      %p329 = por %p327, %p328
      %p330 = scmp.ne.s32.totalorder %s322, %s324
      %p331 = scmp.eq.s32.totalorder %s41, 1
      %p332 = por %p330, %p331
      %p333 = scmp.ne.s32.totalorder %s324, %s325
      %p334 = scmp.eq.s32.totalorder %s41, 0
      %p335 = por %p333, %p334
      %p336 = scmp.ne.s32.totalorder %s324, %s325
      %p337 = scmp.eq.s32.totalorder %s42, 1
      %p338 = por %p336, %p337
      %p340 = scmp.ne.s32.totalorder %s325, %s339
      %p341 = scmp.eq.s32.totalorder %s42, 0
      %p342 = por %p340, %p341
      %s344 = sadd.s32 %s343, 1
      %p347 = scmp.eq.s32.totalorder %s36, 1
      %p348 = scmp.ne.s32.totalorder %s343, %s345
      %p349 = scmp.eq.s32.totalorder %s36, 0
      %p350 = por %p348, %p349
      %p351 = scmp.ne.s32.totalorder %s343, %s345
      %p352 = scmp.eq.s32.totalorder %s41, 1
      %p353 = por %p351, %p352
      %p354 = scmp.ne.s32.totalorder %s345, %s346
      %p355 = scmp.eq.s32.totalorder %s41, 0
      %p356 = por %p354, %p355
      %p357 = scmp.ne.s32.totalorder %s345, %s346
      %p358 = scmp.eq.s32.totalorder %s42, 1
      %p359 = por %p357, %p358
      %p361 = scmp.ne.s32.totalorder %s346, %s360
      %p362 = scmp.eq.s32.totalorder %s42, 0
      %p363 = por %p361, %p362
      %s365 = sadd.s32 %s364, 1
      %p368 = scmp.eq.s32.totalorder %s36, 1
      %p369 = scmp.ne.s32.totalorder %s364, %s366
      %p370 = scmp.eq.s32.totalorder %s36, 0
      %p371 = por %p369, %p370
      %p372 = scmp.ne.s32.totalorder %s364, %s366
      %p373 = scmp.eq.s32.totalorder %s41, 1
      %p374 = por %p372, %p373
      %p375 = scmp.ne.s32.totalorder %s366, %s367
      %p376 = scmp.eq.s32.totalorder %s41, 0
      %p377 = por %p375, %p376
      %p378 = scmp.ne.s32.totalorder %s366, %s367
      %p379 = scmp.eq.s32.totalorder %s42, 1
      %p380 = por %p378, %p379
      %p382 = scmp.ne.s32.totalorder %s367, %s381
      %p383 = scmp.eq.s32.totalorder %s42, 0
      %p384 = por %p382, %p383
      %s386 = sadd.s32 %s385, 1
      %p389 = scmp.eq.s32.totalorder %s36, 1
      %p390 = scmp.ne.s32.totalorder %s385, %s387
      %p391 = scmp.eq.s32.totalorder %s36, 0
      %p392 = por %p390, %p391
      %p393 = scmp.ne.s32.totalorder %s385, %s387
      %p394 = scmp.eq.s32.totalorder %s41, 1
      %p395 = por %p393, %p394
      %p396 = scmp.ne.s32.totalorder %s387, %s388
      %p397 = scmp.eq.s32.totalorder %s41, 0
      %p398 = por %p396, %p397
      %p399 = scmp.ne.s32.totalorder %s387, %s388
      %p400 = scmp.eq.s32.totalorder %s42, 1
      %p401 = por %p399, %p400
      %p403 = scmp.ne.s32.totalorder %s388, %s402
      %p404 = scmp.eq.s32.totalorder %s42, 0
      %p405 = por %p403, %p404
      %s407 = sadd.s32 %s406, 1
      %p410 = scmp.eq.s32.totalorder %s36, 1
      %p411 = scmp.ne.s32.totalorder %s406, %s408
      %p412 = scmp.eq.s32.totalorder %s36, 0
      %p413 = por %p411, %p412
      %p414 = scmp.ne.s32.totalorder %s406, %s408
      %p415 = scmp.eq.s32.totalorder %s41, 1
      %p416 = por %p414, %p415
      %p417 = scmp.ne.s32.totalorder %s408, %s409
      %p418 = scmp.eq.s32.totalorder %s41, 0
      %p419 = por %p417, %p418
      %p420 = scmp.ne.s32.totalorder %s408, %s409
      %p421 = scmp.eq.s32.totalorder %s42, 1
      %p422 = por %p420, %p421
      %p424 = scmp.ne.s32.totalorder %s409, %s423
      %p425 = scmp.eq.s32.totalorder %s42, 0
      %p426 = por %p424, %p425
      %s428 = sadd.s32 %s427, 1
      %p431 = scmp.eq.s32.totalorder %s36, 1
      %p432 = scmp.ne.s32.totalorder %s427, %s429
      %p433 = scmp.eq.s32.totalorder %s36, 0
      %p434 = por %p432, %p433
      %p435 = scmp.ne.s32.totalorder %s427, %s429
      %p436 = scmp.eq.s32.totalorder %s41, 1
      %p437 = por %p435, %p436
      %p438 = scmp.ne.s32.totalorder %s429, %s430
      %p439 = scmp.eq.s32.totalorder %s41, 0
      %p440 = por %p438, %p439
      %p441 = scmp.ne.s32.totalorder %s429, %s430
      %p442 = scmp.eq.s32.totalorder %s42, 1
      %p443 = por %p441, %p442
      %p445 = scmp.ne.s32.totalorder %s430, %s444
      %p446 = scmp.eq.s32.totalorder %s42, 0
      %p447 = por %p445, %p446
      %s449 = sadd.s32 %s448, 1
      %p452 = scmp.eq.s32.totalorder %s36, 1
      %p453 = scmp.ne.s32.totalorder %s448, %s450
      %p454 = scmp.eq.s32.totalorder %s36, 0
      %p455 = por %p453, %p454
      %p456 = scmp.ne.s32.totalorder %s448, %s450
      %p457 = scmp.eq.s32.totalorder %s41, 1
      %p458 = por %p456, %p457
      %p459 = scmp.ne.s32.totalorder %s450, %s451
      %p460 = scmp.eq.s32.totalorder %s41, 0
      %p461 = por %p459, %p460
      %p462 = scmp.ne.s32.totalorder %s450, %s451
      %p463 = scmp.eq.s32.totalorder %s42, 1
      %p464 = por %p462, %p463
      %p466 = scmp.ne.s32.totalorder %s451, %s465
      %p467 = scmp.eq.s32.totalorder %s42, 0
      %p468 = por %p466, %p467
      %s470 = sadd.s32 %s469, 1
      %p473 = scmp.eq.s32.totalorder %s36, 1
      %p474 = scmp.ne.s32.totalorder %s469, %s471
      %p475 = scmp.eq.s32.totalorder %s36, 0
      %p476 = por %p474, %p475
      %p477 = scmp.ne.s32.totalorder %s469, %s471
      %p478 = scmp.eq.s32.totalorder %s41, 1
      %p479 = por %p477, %p478
      %p480 = scmp.ne.s32.totalorder %s471, %s472
      %p481 = scmp.eq.s32.totalorder %s41, 0
      %p482 = por %p480, %p481
      %p483 = scmp.ne.s32.totalorder %s471, %s472
      %p484 = scmp.eq.s32.totalorder %s42, 1
      %p485 = por %p483, %p484
      %p487 = scmp.ne.s32.totalorder %s472, %s486
      %p488 = scmp.eq.s32.totalorder %s42, 0
      %p489 = por %p487, %p488
      %s491 = sadd.s32 %s490, 1
      %p494 = scmp.eq.s32.totalorder %s36, 1
      %p495 = scmp.ne.s32.totalorder %s490, %s492
      %p496 = scmp.eq.s32.totalorder %s36, 0
      %p497 = por %p495, %p496
      %p498 = scmp.ne.s32.totalorder %s490, %s492
      %p499 = scmp.eq.s32.totalorder %s41, 1
      %p500 = por %p498, %p499
      %p501 = scmp.ne.s32.totalorder %s492, %s493
      %p502 = scmp.eq.s32.totalorder %s41, 0
      %p503 = por %p501, %p502
      %p504 = scmp.ne.s32.totalorder %s492, %s493
      %p505 = scmp.eq.s32.totalorder %s42, 1
      %p506 = por %p504, %p505
      %p508 = scmp.ne.s32.totalorder %s493, %s507
      %p509 = scmp.eq.s32.totalorder %s42, 0
      %p510 = por %p508, %p509
      %s512 = sadd.s32 %s511, 1
      %p515 = scmp.eq.s32.totalorder %s36, 1
      %p516 = scmp.ne.s32.totalorder %s511, %s513
      %p517 = scmp.eq.s32.totalorder %s36, 0
      %p518 = por %p516, %p517
      %p519 = scmp.ne.s32.totalorder %s511, %s513
      %p520 = scmp.eq.s32.totalorder %s41, 1
      %p521 = por %p519, %p520
      %p522 = scmp.ne.s32.totalorder %s513, %s514
      %p523 = scmp.eq.s32.totalorder %s41, 0
      %p524 = por %p522, %p523
      %p525 = scmp.ne.s32.totalorder %s513, %s514
      %p526 = scmp.eq.s32.totalorder %s42, 1
      %p527 = por %p525, %p526
      %p529 = scmp.ne.s32.totalorder %s514, %s528
      %p530 = scmp.eq.s32.totalorder %s42, 0
      %p531 = por %p529, %p530
      %s533 = sadd.s32 %s532, 1
      %p536 = scmp.eq.s32.totalorder %s36, 1
      %p537 = scmp.ne.s32.totalorder %s532, %s534
      %p538 = scmp.eq.s32.totalorder %s36, 0
      %p539 = por %p537, %p538
      %p540 = scmp.ne.s32.totalorder %s532, %s534
      %p541 = scmp.eq.s32.totalorder %s41, 1
      %p542 = por %p540, %p541
      %p543 = scmp.ne.s32.totalorder %s534, %s535
      %p544 = scmp.eq.s32.totalorder %s41, 0
      %p545 = por %p543, %p544
      %p546 = scmp.ne.s32.totalorder %s534, %s535
      %p547 = scmp.eq.s32.totalorder %s42, 1
      %p548 = por %p546, %p547
      %p550 = scmp.ne.s32.totalorder %s535, %s549
      %p551 = scmp.eq.s32.totalorder %s42, 0
      %p552 = por %p550, %p551
      %s554 = sadd.s32 %s553, 1
      %p557 = scmp.eq.s32.totalorder %s36, 1
      %p558 = scmp.ne.s32.totalorder %s553, %s555
      %p559 = scmp.eq.s32.totalorder %s36, 0
      %p560 = por %p558, %p559
      %p561 = scmp.ne.s32.totalorder %s553, %s555
      %p562 = scmp.eq.s32.totalorder %s41, 1
      %p563 = por %p561, %p562
      %p564 = scmp.ne.s32.totalorder %s555, %s556
      %p565 = scmp.eq.s32.totalorder %s41, 0
      %p566 = por %p564, %p565
      %p567 = scmp.ne.s32.totalorder %s555, %s556
      %p568 = scmp.eq.s32.totalorder %s42, 1
      %p569 = por %p567, %p568
      %p571 = scmp.ne.s32.totalorder %s556, %s570
      %p572 = scmp.eq.s32.totalorder %s42, 0
      %p573 = por %p571, %p572
      %s575 = sadd.s32 %s574, 1
      %p578 = scmp.eq.s32.totalorder %s36, 1
      %p579 = scmp.ne.s32.totalorder %s574, %s576
      %p580 = scmp.eq.s32.totalorder %s36, 0
      %p581 = por %p579, %p580
      %p582 = scmp.ne.s32.totalorder %s574, %s576
      %p583 = scmp.eq.s32.totalorder %s41, 1
      %p584 = por %p582, %p583
      %p585 = scmp.ne.s32.totalorder %s576, %s577
      %p586 = scmp.eq.s32.totalorder %s41, 0
      %p587 = por %p585, %p586
      %p588 = scmp.ne.s32.totalorder %s576, %s577
      %p589 = scmp.eq.s32.totalorder %s42, 1
      %p590 = por %p588, %p589
      %p592 = scmp.ne.s32.totalorder %s577, %s591
      %p593 = scmp.eq.s32.totalorder %s42, 0
      %p594 = por %p592, %p593
      %s596 = sadd.s32 %s595, 1
      %p599 = scmp.eq.s32.totalorder %s36, 1
      %p600 = scmp.ne.s32.totalorder %s595, %s597
      %p601 = scmp.eq.s32.totalorder %s36, 0
      %p602 = por %p600, %p601
      %p603 = scmp.ne.s32.totalorder %s595, %s597
      %p604 = scmp.eq.s32.totalorder %s41, 1
      %p605 = por %p603, %p604
      %p606 = scmp.ne.s32.totalorder %s597, %s598
      %p607 = scmp.eq.s32.totalorder %s41, 0
      %p608 = por %p606, %p607
      %p609 = scmp.ne.s32.totalorder %s597, %s598
      %p610 = scmp.eq.s32.totalorder %s42, 1
      %p611 = por %p609, %p610
      %p613 = scmp.ne.s32.totalorder %s598, %s612
      %p614 = scmp.eq.s32.totalorder %s42, 0
      %p615 = por %p613, %p614
      %s616 = ssub.s32 %s36, %s43
      %p617 = scmp.eq.s32.totalorder %s616, 0
      %s619 = sadd.s32 %s618, 1
      %s620 = scalar_select %p617, %s618, %s619
      %p623 = pneg %p617
      %p624 = scmp.eq.s32.totalorder %s36, 1
      %p625 = por %p623, %p624
      %p626 = scmp.ne.s32.totalorder %s618, %s621
      %p627 = scmp.eq.s32.totalorder %s36, 0
      %p628 = por %p626, %p627
      %p629 = scmp.ne.s32.totalorder %s618, %s621
      %p630 = scmp.eq.s32.totalorder %s41, 1
      %p631 = por %p629, %p630
      %p632 = scmp.ne.s32.totalorder %s621, %s622
      %p633 = scmp.eq.s32.totalorder %s41, 0
      %p634 = por %p632, %p633
      %p635 = scmp.ne.s32.totalorder %s621, %s622
      %p636 = scmp.eq.s32.totalorder %s42, 1
      %p637 = por %p635, %p636
      %p639 = scmp.ne.s32.totalorder %s622, %s638
      %p640 = scmp.eq.s32.totalorder %s42, 0
      %p641 = por %p639, %p640
      %p642 = scmp.le.s32.totalorder 1, %s36
      %p643 = scmp.lt.s32.totalorder %s36, 3
      %p644 = pnand %p642, %p643
      %p645 = pneg %p644
      // Predicated region
      $region9: #{tpu_custom_call.1} parent=5 // pred_check
        _
      $region10: #{tpu_custom_call.1} parent=5 // pred_check_branch
        %647 = sbr.rel (%p644) target = $region12
      $region11: #{tpu_custom_call.1} parent=5 // pred_region
        %s648 = ssub.s32 %s36, 1
        // Predicated region
        $region13: #{tpu_custom_call.1} parent=11 // pred_check
          %p649 = pneg %p83
        $region14: #{tpu_custom_call.1} parent=11 // pred_check_branch
          %651 = sbr.rel (%p649) target = $region16
        $region15: #{tpu_custom_call.1} parent=11 // pred_region
          _
        $region16: #{tpu_custom_call.1} parent=11 // pred_fallthru
          _
        // Predicated region
        $region17: #{tpu_custom_call.1} parent=11 // pred_check
          %p652 = pneg %p104
        $region18: #{tpu_custom_call.1} parent=11 // pred_check_branch
          %654 = sbr.rel (%p652) target = $region20
        $region19: #{tpu_custom_call.1} parent=11 // pred_region
          _
        $region20: #{tpu_custom_call.1} parent=11 // pred_fallthru
          _
        // Predicated region
        $region21: #{tpu_custom_call.1} parent=11 // pred_check
          %p655 = pneg %p125
        $region22: #{tpu_custom_call.1} parent=11 // pred_check_branch
          %657 = sbr.rel (%p655) target = $region24
        $region23: #{tpu_custom_call.1} parent=11 // pred_region
          _
        $region24: #{tpu_custom_call.1} parent=11 // pred_fallthru
          _
        // Predicated region
        $region25: #{tpu_custom_call.1} parent=11 // pred_check
          %p658 = pneg %p146
        $region26: #{tpu_custom_call.1} parent=11 // pred_check_branch
          %660 = sbr.rel (%p658) target = $region28
        $region27: #{tpu_custom_call.1} parent=11 // pred_region
          _
        $region28: #{tpu_custom_call.1} parent=11 // pred_fallthru
          _
        // Predicated region
        $region29: #{tpu_custom_call.1} parent=11 // pred_check
          %p661 = pneg %p167
        $region30: #{tpu_custom_call.1} parent=11 // pred_check_branch
          %663 = sbr.rel (%p661) target = $region32
        $region31: #{tpu_custom_call.1} parent=11 // pred_region
          _
        $region32: #{tpu_custom_call.1} parent=11 // pred_fallthru
          _
        // Predicated region
        $region33: #{tpu_custom_call.1} parent=11 // pred_check
          %p664 = pneg %p188
        $region34: #{tpu_custom_call.1} parent=11 // pred_check_branch
          %666 = sbr.rel (%p664) target = $region36
        $region35: #{tpu_custom_call.1} parent=11 // pred_region
          _
        $region36: #{tpu_custom_call.1} parent=11 // pred_fallthru
          _
        // Predicated region
        $region37: #{tpu_custom_call.1} parent=11 // pred_check
          %p667 = pneg %p209
        $region38: #{tpu_custom_call.1} parent=11 // pred_check_branch
          %669 = sbr.rel (%p667) target = $region40
        $region39: #{tpu_custom_call.1} parent=11 // pred_region
          _
        $region40: #{tpu_custom_call.1} parent=11 // pred_fallthru
          _
        // Predicated region
        $region41: #{tpu_custom_call.1} parent=11 // pred_check
          %p670 = pneg %p230
        $region42: #{tpu_custom_call.1} parent=11 // pred_check_branch
          %672 = sbr.rel (%p670) target = $region44
        $region43: #{tpu_custom_call.1} parent=11 // pred_region
          _
        $region44: #{tpu_custom_call.1} parent=11 // pred_fallthru
          _
        // Predicated region
        $region45: #{tpu_custom_call.1} parent=11 // pred_check
          %p673 = pneg %p251
        $region46: #{tpu_custom_call.1} parent=11 // pred_check_branch
          %675 = sbr.rel (%p673) target = $region48
        $region47: #{tpu_custom_call.1} parent=11 // pred_region
          _
        $region48: #{tpu_custom_call.1} parent=11 // pred_fallthru
          _
        // Predicated region
        $region49: #{tpu_custom_call.1} parent=11 // pred_check
          %p676 = pneg %p272
        $region50: #{tpu_custom_call.1} parent=11 // pred_check_branch
          %678 = sbr.rel (%p676) target = $region52
        $region51: #{tpu_custom_call.1} parent=11 // pred_region
          _
        $region52: #{tpu_custom_call.1} parent=11 // pred_fallthru
          _
        // Predicated region
        $region53: #{tpu_custom_call.1} parent=11 // pred_check
          %p679 = pneg %p293
        $region54: #{tpu_custom_call.1} parent=11 // pred_check_branch
          %681 = sbr.rel (%p679) target = $region56
        $region55: #{tpu_custom_call.1} parent=11 // pred_region
          _
        $region56: #{tpu_custom_call.1} parent=11 // pred_fallthru
          _
        // Predicated region
        $region57: #{tpu_custom_call.1} parent=11 // pred_check
          %p682 = pneg %p314
        $region58: #{tpu_custom_call.1} parent=11 // pred_check_branch
          %684 = sbr.rel (%p682) target = $region60
        $region59: #{tpu_custom_call.1} parent=11 // pred_region
          _
        $region60: #{tpu_custom_call.1} parent=11 // pred_fallthru
          _
        // Predicated region
        $region61: #{tpu_custom_call.1} parent=11 // pred_check
          %p685 = pneg %p335
        $region62: #{tpu_custom_call.1} parent=11 // pred_check_branch
          %687 = sbr.rel (%p685) target = $region64
        $region63: #{tpu_custom_call.1} parent=11 // pred_region
          _
        $region64: #{tpu_custom_call.1} parent=11 // pred_fallthru
          _
        // Predicated region
        $region65: #{tpu_custom_call.1} parent=11 // pred_check
          %p688 = pneg %p356
        $region66: #{tpu_custom_call.1} parent=11 // pred_check_branch
          %690 = sbr.rel (%p688) target = $region68
        $region67: #{tpu_custom_call.1} parent=11 // pred_region
          _
        $region68: #{tpu_custom_call.1} parent=11 // pred_fallthru
          _
        // Predicated region
        $region69: #{tpu_custom_call.1} parent=11 // pred_check
          %p691 = pneg %p377
        $region70: #{tpu_custom_call.1} parent=11 // pred_check_branch
          %693 = sbr.rel (%p691) target = $region72
        $region71: #{tpu_custom_call.1} parent=11 // pred_region
          _
        $region72: #{tpu_custom_call.1} parent=11 // pred_fallthru
          _
        // Predicated region
        $region73: #{tpu_custom_call.1} parent=11 // pred_check
          %p694 = pneg %p398
        $region74: #{tpu_custom_call.1} parent=11 // pred_check_branch
          %696 = sbr.rel (%p694) target = $region76
        $region75: #{tpu_custom_call.1} parent=11 // pred_region
          _
        $region76: #{tpu_custom_call.1} parent=11 // pred_fallthru
          _
        // Predicated region
        $region77: #{tpu_custom_call.1} parent=11 // pred_check
          %p697 = pneg %p419
        $region78: #{tpu_custom_call.1} parent=11 // pred_check_branch
          %699 = sbr.rel (%p697) target = $region80
        $region79: #{tpu_custom_call.1} parent=11 // pred_region
          _
        $region80: #{tpu_custom_call.1} parent=11 // pred_fallthru
          _
        // Predicated region
        $region81: #{tpu_custom_call.1} parent=11 // pred_check
          %p700 = pneg %p440
        $region82: #{tpu_custom_call.1} parent=11 // pred_check_branch
          %702 = sbr.rel (%p700) target = $region84
        $region83: #{tpu_custom_call.1} parent=11 // pred_region
          _
        $region84: #{tpu_custom_call.1} parent=11 // pred_fallthru
          _
        // Predicated region
        $region85: #{tpu_custom_call.1} parent=11 // pred_check
          %p703 = pneg %p461
        $region86: #{tpu_custom_call.1} parent=11 // pred_check_branch
          %705 = sbr.rel (%p703) target = $region88
        $region87: #{tpu_custom_call.1} parent=11 // pred_region
          _
        $region88: #{tpu_custom_call.1} parent=11 // pred_fallthru
          _
        // Predicated region
        $region89: #{tpu_custom_call.1} parent=11 // pred_check
          %p706 = pneg %p482
        $region90: #{tpu_custom_call.1} parent=11 // pred_check_branch
          %708 = sbr.rel (%p706) target = $region92
        $region91: #{tpu_custom_call.1} parent=11 // pred_region
          _
        $region92: #{tpu_custom_call.1} parent=11 // pred_fallthru
          _
        // Predicated region
        $region93: #{tpu_custom_call.1} parent=11 // pred_check
          %p709 = pneg %p503
        $region94: #{tpu_custom_call.1} parent=11 // pred_check_branch
          %711 = sbr.rel (%p709) target = $region96
        $region95: #{tpu_custom_call.1} parent=11 // pred_region
          _
        $region96: #{tpu_custom_call.1} parent=11 // pred_fallthru
          _
        // Predicated region
        $region97: #{tpu_custom_call.1} parent=11 // pred_check
          %p712 = pneg %p524
        $region98: #{tpu_custom_call.1} parent=11 // pred_check_branch
          %714 = sbr.rel (%p712) target = $region100
        $region99: #{tpu_custom_call.1} parent=11 // pred_region
          _
        $region100: #{tpu_custom_call.1} parent=11 // pred_fallthru
          _
        // Predicated region
        $region101: #{tpu_custom_call.1} parent=11 // pred_check
          %p715 = pneg %p545
        $region102: #{tpu_custom_call.1} parent=11 // pred_check_branch
          %717 = sbr.rel (%p715) target = $region104
        $region103: #{tpu_custom_call.1} parent=11 // pred_region
          _
        $region104: #{tpu_custom_call.1} parent=11 // pred_fallthru
          _
        // Predicated region
        $region105: #{tpu_custom_call.1} parent=11 // pred_check
          %p718 = pneg %p566
        $region106: #{tpu_custom_call.1} parent=11 // pred_check_branch
          %720 = sbr.rel (%p718) target = $region108
        $region107: #{tpu_custom_call.1} parent=11 // pred_region
          _
        $region108: #{tpu_custom_call.1} parent=11 // pred_fallthru
          _
        // Predicated region
        $region109: #{tpu_custom_call.1} parent=11 // pred_check
          %p721 = pneg %p587
        $region110: #{tpu_custom_call.1} parent=11 // pred_check_branch
          %723 = sbr.rel (%p721) target = $region112
        $region111: #{tpu_custom_call.1} parent=11 // pred_region
          _
        $region112: #{tpu_custom_call.1} parent=11 // pred_fallthru
          _
        // Predicated region
        $region113: #{tpu_custom_call.1} parent=11 // pred_check
          %p724 = pneg %p608
        $region114: #{tpu_custom_call.1} parent=11 // pred_check_branch
          %726 = sbr.rel (%p724) target = $region116
        $region115: #{tpu_custom_call.1} parent=11 // pred_region
          _
        $region116: #{tpu_custom_call.1} parent=11 // pred_fallthru
          _
      $region12: #{tpu_custom_call.1} parent=5 // pred_fallthru
        _
      %p727 = scmp.lt.s32.totalorder %s36, 2
      // Predicated region
      $region117: #{tpu_custom_call.1} parent=5 // pred_check
        %p728 = pneg %p727
      $region118: #{tpu_custom_call.1} parent=5 // pred_check_branch
        %730 = sbr.rel (%p728) target = $region120
      $region119: #{tpu_custom_call.1} parent=5 // pred_region
        // Predicated region
        $region121: #{tpu_custom_call.1} parent=119 // pred_check
          %p731 = pneg %p56
        $region122: #{tpu_custom_call.1} parent=119 // pred_check_branch
          %733 = sbr.rel (%p731) target = $region124
        $region123: #{tpu_custom_call.1} parent=119 // pred_region
          %p734 = scmp.lt.s32.totalorder %s36, 1
          %s735 = scalar_select %p734, %s36, 1
          %s736 = smul.addr %s735, 2
          %s737 = smul.addr %s736, 8
          %s738 = scalar_lea.vmem %s0, %s737
        $region124: #{tpu_custom_call.1} parent=119 // pred_fallthru
          _
      $region120: #{tpu_custom_call.1} parent=5 // pred_fallthru
        _
      %p739 = scmp.le.s32.totalorder 1, %s36
      %p740 = scmp.lt.s32.totalorder %s36, 3
      %p741 = pnand %p739, %p740
      %p742 = pneg %p741
      // Predicated region
      $region125: #{tpu_custom_call.1} parent=5 // pred_check
        _
      $region126: #{tpu_custom_call.1} parent=5 // pred_check_branch
        %744 = sbr.rel (%p741) target = $region128
      $region127: #{tpu_custom_call.1} parent=5 // pred_region
        %s745 = ssub.s32 %s36, 1
        %p746 = scmp.lt.s32.totalorder %s41, 1
        %s747 = scalar_select %p746, %s41, 1
        %s748 = smul.addr %s747, 2
        %s749 = smul.addr %s748, 8
        %s750 = scalar_lea.vmem %s0, %s749
        %p751 = pneg %p62
        %p752 = pneg %p59
        %p753 = pneg %p83
        %p754 = pneg %p80
        %p755 = pneg %p104
        %p756 = pneg %p101
        %p757 = pneg %p125
        %p758 = pneg %p122
        %p759 = pneg %p146
        %p760 = pneg %p143
        %p761 = pneg %p167
        %p762 = pneg %p164
        %p763 = pneg %p188
        %p764 = pneg %p185
        %p765 = pneg %p209
        %p766 = pneg %p206
        %p767 = pneg %p230
        %p768 = pneg %p227
        %p769 = pneg %p251
        %p770 = pneg %p248
        %p771 = pneg %p272
        %p772 = pneg %p269
        %p773 = pneg %p293
        %p774 = pneg %p290
        %p775 = pneg %p314
        %p776 = pneg %p311
        %p777 = pneg %p335
        %p778 = pneg %p332
        %p779 = pneg %p356
        %p780 = pneg %p353
        %p781 = pneg %p377
        %p782 = pneg %p374
        %p783 = pneg %p398
        %p784 = pneg %p395
        %p785 = pneg %p419
        %p786 = pneg %p416
        %p787 = pneg %p440
        %p788 = pneg %p437
        %p789 = pneg %p461
        %p790 = pneg %p458
        %p791 = pneg %p482
        %p792 = pneg %p479
        %p793 = pneg %p503
        %p794 = pneg %p500
        %p795 = pneg %p524
        %p796 = pneg %p521
        %p797 = pneg %p545
        %p798 = pneg %p542
        %p799 = pneg %p566
        %p800 = pneg %p563
        %p801 = pneg %p587
        %p802 = pneg %p584
        %p803 = pneg %p608
        %p804 = pneg %p605
        %p805 = pneg %p634
        %p806 = pneg %p631
        %s807 = sand.u32 %s621, 1
        %s808 = scalar_lea.sflag [#allocation3], %s807
        %s809 = sand.u32 %s621, 1
        %s810 = smul.addr %s809, 16
        %s811 = scalar_lea.vmem [#allocation2], %s810
        %p812 = scmp.lt.s32.totalorder %s41, 1
        %s813 = scalar_select %p812, %s41, 1
        %s814 = smul.addr %s813, 2
        %s815 = smul.addr %s814, 8
        %s816 = scalar_lea.vmem %s0, %s815
        %v818 = vld [vmem:[%s816] sm:$0xff]
        %v819 = vld [vmem:[%s816 + $0x8] sm:$0xff]
        %v820 = vlaneseq
        %v821 = vand.u32 %v820, 127
        %v822 = vpack.c.bf16 %v819, %v818
        %v823 = vld [vmem:[%s1] sm:$0xf]
        %v824 = vld [vmem:[%s1 + $0x4] sm:$0x3]
        %v827 = vunpack.c.l.b16 %v823
        %v828 = vunpack.c.l.b16 %v824
        %v829 = vpack.c.b16 %v828, %v827
        %vm830 = vcmask 130048
        %v832 = vsel %vm830, %v829, 0
        %834 = vmatprep.subr.bf16.mxu0 0
        %835 = vmatpush1.bf16.msra.mxu0 0
        %836 = vmatprep.subr.bf16.mxu0 0
        %837 = vmatpush1.bf16.msra.mxu0 0
        %838 = vmatprep.subr.bf16.mxu0 0
        %839 = vmatpush1.bf16.msra.mxu0 0
        %840 = vmatprep.subr.bf16.mxu0 0
        %841 = vmatpush1.bf16.msra.mxu0 0
        %842 = vmatprep.subr.bf16.mxu0 0
        %843 = vmatpush1.bf16.msra.mxu0 0
        %844 = vmatprep.subr.bf16.mxu0 0
        %845 = vmatpush1.bf16.msra.mxu0 0
        %846 = vmatprep.subr.bf16.mxu0 0
        %847 = vmatpush1.bf16.msra.mxu0 0
        %848 = vmatprep.subr.bf16.mxu0 0
        %849 = vmatpush1.bf16.msra.mxu0 %v822
        %850 = vmatprep.subr.bf16.mxu0 0
        %851 = vmatpush2.bf16.msra.mxu0 0
        %852 = vmatprep.subr.bf16.mxu0 0
        %853 = vmatpush2.bf16.msra.mxu0 0
        %854 = vmatprep.subr.bf16.mxu0 0
        %855 = vmatpush2.bf16.msra.mxu0 0
        %856 = vmatprep.subr.bf16.mxu0 0
        %857 = vmatpush2.bf16.msra.mxu0 0
        %858 = vmatprep.subr.bf16.mxu0 0
        %859 = vmatpush2.bf16.msra.mxu0 0
        %860 = vmatprep.subr.bf16.mxu0 0
        %861 = vmatpush2.bf16.msra.mxu0 0
        %862 = vmatprep.subr.bf16.mxu0 0
        %863 = vmatpush2.bf16.msra.mxu0 0
        %864 = vmatprep.subr.bf16.mxu0 0
        %865 = vmatpush2.bf16.msra.mxu0 0
        %866 = vmatprep.mubr.bf16.mxu0 0
        %867 = vmatmul.mubr.bf16.gmra.mxu0 %v832
        %v868 = vpop.f32.mrf.mxu0
        %v869 = vadd.f32 0.0, %v868
        %v870 = vpop.f32.mrf.mxu0
        %v871 = vpop.f32.mrf.mxu0
        %v872 = vadd.f32 0.0, %v871
        %v873 = vpop.f32.mrf.mxu0
        %874 = vdwg.mxu0
        %vm875 = vcmask 1047808
        %876 = vrot.lane.b32.xlu0 %v869, 32
        %v877 = vpop.permute.xlu0 %876
        %v878 = vsel %vm875, %v877, %v869
        %879 = vrot.lane.b32.xlu0 %v878, 32
        %v880 = vpop.permute.xlu0 %879
        %v881 = vsel %vm875, %v880, %v869
        %vm882 = vcmp.ge.s32.totalorder %v821, 1
        %v883 = vsel %vm882, 1, 0
        %vm884 = vcmp.eq.s32.totalorder %v883, 1
        %886 = vrot.lane.b32.xlu0 %v881, 97
        %v887 = vpop.permute.xlu0 %886
        %v889 = vsel %vm884, %v887, 0.0
        %v891 = vrot.slane %v889, 4
        %v893 = vadd.f32 %v869, %v891
        %894 = vrot.lane.b32.xlu0 %v872, 32
        %v895 = vpop.permute.xlu0 %894
        %v896 = vsel %vm875, %v895, %v872
        %897 = vrot.lane.b32.xlu0 %v896, 32
        %v898 = vpop.permute.xlu0 %897
        %v899 = vsel %vm875, %v898, %v872
        %vm900 = vcmp.lt.s32.totalorder %v821, 31
        %v901 = vsel %vm900, 1, 0
        %vm902 = vcmp.eq.s32.totalorder %v901, 1
        %904 = vrot.lane.b32.xlu0 %v899, 127
        %v905 = vpop.permute.xlu0 %904
        %v907 = vsel %vm902, %v905, 0.0
        %v909 = vrot.slane %v907, 4
        %v911 = vadd.f32 %v893, %v909
        %v912 = vld [vmem:[%s2] sm:$0xf]
        %914 = vset.pattern.permute.xlu0 0
        %915 = vperm.xlu0 %914, %v912
        %v916 = vpop.permute.xlu0 %915
        %v917 = vrot.slane %v916, 4
        %v919 = vadd.f32 %v911, %v917
        %v920 = vld [vmem:[%s3] sm:$0xf]
        %v921 = vld [vmem:[%s4] sm:$0xf]
        %v923 = vrot.slane %v919, 4
        %vm925 = vcmask 257024
        %v926 = vsel %vm925, %v923, 0.0
        %927 = vadd.xlane.f32.xlu0 %v926
        %v928 = vpop.xlane.xlu0 %927
        %v929 = vrot.slane %v928, 4
        %v930 = vadd.f32 %v928, %v929
        %v931 = vrot.slane %v930, 2
        %v932 = vadd.f32 %v930, %v931
        %v933 = vrot.slane %v932, 1
        %v934 = vadd.f32 %v932, %v933
        %s935 = vtos %v934
        %v936 = vstv %s935
        %v937 = vmul.f32 %v919, %v919
        %v939 = vrot.slane %v937, 4
        %v941 = vsel %vm925, %v939, 0.0
        %942 = vadd.xlane.f32.xlu0 %v941
        %v943 = vpop.xlane.xlu0 %942
        %v944 = vrot.slane %v943, 4
        %v945 = vadd.f32 %v943, %v944
        %v946 = vrot.slane %v945, 2
        %v947 = vadd.f32 %v945, %v946
        %v948 = vrot.slane %v947, 1
        %v949 = vadd.f32 %v947, %v948
        %s950 = vtos %v949
        %v951 = vstv %s950
        %v952 = vmul.f32 %v936, 0.0078125
        %v953 = vmul.f32 %v951, 0.0078125
        %v954 = vmul.f32 %v952, %v952
        %v955 = vsub.f32 %v953, %v954
        %v956 = vmax.f32 %v955, 0.0
        %v957 = vsub.f32 %v919, %v952
        %v958 = vadd.f32 %v956, 1e-05
        %v959 = vrsqrt.pop %v958
        %v960 = vmul.f32 %v957, %v959
        %962 = vset.pattern.permute.xlu0 0
        %963 = vperm.xlu0 %962, %v920
        %v964 = vpop.permute.xlu0 %963
        %v965 = vrot.slane %v964, 4
        %v967 = vmul.f32 %v960, %v965
        %969 = vset.pattern.permute.xlu0 0
        %970 = vperm.xlu0 %969, %v921
        %v971 = vpop.permute.xlu0 %970
        %v972 = vrot.slane %v971, 4
        %v974 = vadd.f32 %v967, %v972
        %v975 = vmul.f32 %v974, 0.5
        %v976 = vmul.f32 %v974, 0.044715
        %v977 = vmul.f32 %v976, %v974
        %v978 = vmul.f32 %v977, %v974
        %v979 = vadd.f32 %v974, %v978
        %v980 = vmul.f32 %v979, 0.7978846
        %v981 = vtanh.pop %v980
        %v982 = vadd.f32 %v981, 1.0
        %v983 = vmul.f32 %v975, %v982
        %v984 = vpack.c.bf16 %v983, %v983
        %v985 = vld [vmem:[%s5] sm:$0xf]
        %v986 = vld [vmem:[%s5 + $0x4] sm:$0xf]
        %v987 = vld [vmem:[%s7] sm:$0xff]
        %v988 = vld [vmem:[%s7 + $0x8] sm:$0xff]
        %990 = vset.pattern.permute.xlu0 0
        %991 = vperm.xlu0 %990, %v987
        %v992 = vpop.permute.xlu0 %991
        %995 = vset.pattern.permute.xlu0 0
        %996 = vperm.xlu0 %995, %v988
        %v997 = vpop.permute.xlu0 %996
        %v1001 = vunpack.c.l.b16 %v985
        %v1002 = vunpack.c.l.b16 %v986
        %v1003 = vpack.c.b16 %v1002, %v1001
        %v1005 = vrot.slane %v984, 2
        %vm1006 = vcmask 31744
        %v1008 = vsel %vm1006, %v1003, 0
        %vm1010 = vcmask 1041408
        %v1012 = vsel %vm1010, %v1005, 0
        %1014 = vmatprep.subr.bf16.mxu0 0
        %1015 = vmatpush1.bf16.msra.mxu0 0
        %1016 = vmatprep.subr.bf16.mxu0 0
        %1017 = vmatpush1.bf16.msra.mxu0 0
        %1018 = vmatprep.subr.bf16.mxu0 0
        %1019 = vmatpush1.bf16.msra.mxu0 0
        %1020 = vmatprep.subr.bf16.mxu0 0
        %1021 = vmatpush1.bf16.msra.mxu0 0
        %1022 = vmatprep.subr.bf16.mxu0 0
        %1023 = vmatpush1.bf16.msra.mxu0 0
        %1024 = vmatprep.subr.bf16.mxu0 0
        %1025 = vmatpush1.bf16.msra.mxu0 0
        %1026 = vmatprep.subr.bf16.mxu0 0
        %1027 = vmatpush1.bf16.msra.mxu0 0
        %1028 = vmatprep.subr.bf16.mxu0 0
        %1029 = vmatpush1.bf16.msra.mxu0 %v1012
        %1030 = vmatprep.subr.bf16.mxu0 0
        %1031 = vmatpush2.bf16.msra.mxu0 0
        %1032 = vmatprep.subr.bf16.mxu0 0
        %1033 = vmatpush2.bf16.msra.mxu0 0
        %1034 = vmatprep.subr.bf16.mxu0 0
        %1035 = vmatpush2.bf16.msra.mxu0 0
        %1036 = vmatprep.subr.bf16.mxu0 0
        %1037 = vmatpush2.bf16.msra.mxu0 0
        %1038 = vmatprep.subr.bf16.mxu0 0
        %1039 = vmatpush2.bf16.msra.mxu0 0
        %1040 = vmatprep.subr.bf16.mxu0 0
        %1041 = vmatpush2.bf16.msra.mxu0 0
        %1042 = vmatprep.subr.bf16.mxu0 0
        %1043 = vmatpush2.bf16.msra.mxu0 0
        %1044 = vmatprep.subr.bf16.mxu0 0
        %1045 = vmatpush2.bf16.msra.mxu0 0
        %1046 = vmatprep.mubr.bf16.mxu0 0
        %1047 = vmatmul.mubr.bf16.gmra.mxu0 %v1008
        %v1048 = vpop.f32.mrf.mxu0
        %v1049 = vadd.f32 %v992, %v1048
        %v1050 = vpop.f32.mrf.mxu0
        %v1051 = vpop.f32.mrf.mxu0
        %v1052 = vadd.f32 %v997, %v1051
        %v1053 = vpop.f32.mrf.mxu0
        %1054 = vdwg.mxu0
        %v1055 = vld [vmem:[%s6] sm:$0xf]
        %v1056 = vld [vmem:[%s6 + $0x4] sm:$0xf]
        %v1057 = vld [vmem:[%s8] sm:$0xff]
        %v1058 = vld [vmem:[%s8 + $0x8] sm:$0xff]
        %1060 = vset.pattern.permute.xlu0 0
        %1061 = vperm.xlu0 %1060, %v1057
        %v1062 = vpop.permute.xlu0 %1061
        %1065 = vset.pattern.permute.xlu0 0
        %1066 = vperm.xlu0 %1065, %v1058
        %v1067 = vpop.permute.xlu0 %1066
        %v1071 = vunpack.c.l.b16 %v1055
        %v1072 = vunpack.c.l.b16 %v1056
        %v1073 = vpack.c.b16 %v1072, %v1071
        %v1075 = vsel %vm1006, %v1073, 0
        %1077 = vmatprep.subr.bf16.mxu0 0
        %1078 = vmatpush1.bf16.msra.mxu0 0
        %1079 = vmatprep.subr.bf16.mxu0 0
        %1080 = vmatpush1.bf16.msra.mxu0 0
        %1081 = vmatprep.subr.bf16.mxu0 0
        %1082 = vmatpush1.bf16.msra.mxu0 0
        %1083 = vmatprep.subr.bf16.mxu0 0
        %1084 = vmatpush1.bf16.msra.mxu0 0
        %1085 = vmatprep.subr.bf16.mxu0 0
        %1086 = vmatpush1.bf16.msra.mxu0 0
        %1087 = vmatprep.subr.bf16.mxu0 0
        %1088 = vmatpush1.bf16.msra.mxu0 0
        %1089 = vmatprep.subr.bf16.mxu0 0
        %1090 = vmatpush1.bf16.msra.mxu0 0
        %1091 = vmatprep.subr.bf16.mxu0 0
        %1092 = vmatpush1.bf16.msra.mxu0 %v1012
        %1093 = vmatprep.subr.bf16.mxu0 0
        %1094 = vmatpush2.bf16.msra.mxu0 0
        %1095 = vmatprep.subr.bf16.mxu0 0
        %1096 = vmatpush2.bf16.msra.mxu0 0
        %1097 = vmatprep.subr.bf16.mxu0 0
        %1098 = vmatpush2.bf16.msra.mxu0 0
        %1099 = vmatprep.subr.bf16.mxu0 0
        %1100 = vmatpush2.bf16.msra.mxu0 0
        %1101 = vmatprep.subr.bf16.mxu0 0
        %1102 = vmatpush2.bf16.msra.mxu0 0
        %1103 = vmatprep.subr.bf16.mxu0 0
        %1104 = vmatpush2.bf16.msra.mxu0 0
        %1105 = vmatprep.subr.bf16.mxu0 0
        %1106 = vmatpush2.bf16.msra.mxu0 0
        %1107 = vmatprep.subr.bf16.mxu0 0
        %1108 = vmatpush2.bf16.msra.mxu0 0
        %1109 = vmatprep.mubr.bf16.mxu0 0
        %1110 = vmatmul.mubr.bf16.gmra.mxu0 %v1075
        %v1111 = vpop.f32.mrf.mxu0
        %v1112 = vadd.f32 %v1062, %v1111
        %v1113 = vpop.f32.mrf.mxu0
        %v1114 = vpop.f32.mrf.mxu0
        %v1115 = vadd.f32 %v1067, %v1114
        %v1116 = vpop.f32.mrf.mxu0
        %1117 = vdwg.mxu0
        %vm1118 = vcmask 261120
        %v1119 = vsel %vm1118, %v1049, 0.0
        %v1120 = vsel %vm1118, %v1052, 0.0
        %v1121 = vadd.f32 %v1119, %v1120
        %1122 = vadd.xlane.f32.xlu0 %v1121
        %v1123 = vpop.xlane.xlu0 %1122
        %v1124 = vrot.slane %v1123, 4
        %v1125 = vadd.f32 %v1123, %v1124
        %v1126 = vrot.slane %v1125, 2
        %v1127 = vadd.f32 %v1125, %v1126
        %v1128 = vrot.slane %v1127, 1
        %v1129 = vadd.f32 %v1127, %v1128
        %s1130 = vtos %v1129
        %v1131 = vstv %s1130
        %v1132 = vsel %vm1118, %v1112, 0.0
        %v1133 = vsel %vm1118, %v1115, 0.0
        %v1134 = vadd.f32 %v1132, %v1133
        %1135 = vadd.xlane.f32.xlu0 %v1134
        %v1136 = vpop.xlane.xlu0 %1135
        %v1137 = vrot.slane %v1136, 4
        %v1138 = vadd.f32 %v1136, %v1137
        %v1139 = vrot.slane %v1138, 2
        %v1140 = vadd.f32 %v1138, %v1139
        %v1141 = vrot.slane %v1140, 1
        %v1142 = vadd.f32 %v1140, %v1141
        %s1143 = vtos %v1142
        %v1144 = vstv %s1143
        %v1145 = vadd.f32 %v1131, %v1144
        %v1146 = vmul.f32 %v1049, %v1049
        %v1147 = vmul.f32 %v1052, %v1052
        %v1148 = vsel %vm1118, %v1146, 0.0
        %v1149 = vsel %vm1118, %v1147, 0.0
        %v1150 = vadd.f32 %v1148, %v1149
        %1151 = vadd.xlane.f32.xlu0 %v1150
        %v1152 = vpop.xlane.xlu0 %1151
        %v1153 = vrot.slane %v1152, 4
        %v1154 = vadd.f32 %v1152, %v1153
        %v1155 = vrot.slane %v1154, 2
        %v1156 = vadd.f32 %v1154, %v1155
        %v1157 = vrot.slane %v1156, 1
        %v1158 = vadd.f32 %v1156, %v1157
        %s1159 = vtos %v1158
        %v1160 = vstv %s1159
        %v1161 = vmul.f32 %v1112, %v1112
        %v1162 = vmul.f32 %v1115, %v1115
        %v1163 = vsel %vm1118, %v1161, 0.0
        %v1164 = vsel %vm1118, %v1162, 0.0
        %v1165 = vadd.f32 %v1163, %v1164
        %1166 = vadd.xlane.f32.xlu0 %v1165
        %v1167 = vpop.xlane.xlu0 %1166
        %v1168 = vrot.slane %v1167, 4
        %v1169 = vadd.f32 %v1167, %v1168
        %v1170 = vrot.slane %v1169, 2
        %v1171 = vadd.f32 %v1169, %v1170
        %v1172 = vrot.slane %v1171, 1
        %v1173 = vadd.f32 %v1171, %v1172
        %s1174 = vtos %v1173
        %v1175 = vstv %s1174
        %v1176 = vadd.f32 %v1160, %v1175
        %v1177 = vmul.f32 %v1145, 0.0009765625
        %v1178 = vmul.f32 %v1176, 0.0009765625
        %v1179 = vmul.f32 %v1177, %v1177
        %v1180 = vsub.f32 %v1178, %v1179
        %v1181 = vmax.f32 %v1180, 0.0
        %v1182 = vadd.f32 %v1181, 1e-05
        %v1183 = vrsqrt.pop %v1182
        %v1184 = vsub.f32 %v1049, %v1177
        %v1185 = vsub.f32 %v1052, %v1177
        %v1186 = vmul.f32 %v1184, %v1183
        %v1187 = vmul.f32 %v1185, %v1183
        %v1188 = vld [vmem:[%s9] sm:$0xff]
        %v1189 = vld [vmem:[%s9 + $0x8] sm:$0xff]
        %1191 = vset.pattern.permute.xlu0 0
        %1192 = vperm.xlu0 %1191, %v1188
        %v1193 = vpop.permute.xlu0 %1192
        %1196 = vset.pattern.permute.xlu0 0
        %1197 = vperm.xlu0 %1196, %v1189
        %v1198 = vpop.permute.xlu0 %1197
        %v1200 = vmul.f32 %v1186, %v1193
        %v1201 = vmul.f32 %v1187, %v1198
        %v1202 = vld [vmem:[%s11] sm:$0xff]
        %v1203 = vld [vmem:[%s11 + $0x8] sm:$0xff]
        %1205 = vset.pattern.permute.xlu0 0
        %1206 = vperm.xlu0 %1205, %v1202
        %v1207 = vpop.permute.xlu0 %1206
        %1210 = vset.pattern.permute.xlu0 0
        %1211 = vperm.xlu0 %1210, %v1203
        %v1212 = vpop.permute.xlu0 %1211
        %v1214 = vadd.f32 %v1200, %v1207
        %v1215 = vadd.f32 %v1201, %v1212
        %v1216 = vsub.f32 %v1112, %v1177
        %v1217 = vsub.f32 %v1115, %v1177
        %v1218 = vmul.f32 %v1216, %v1183
        %v1219 = vmul.f32 %v1217, %v1183
        %v1220 = vld [vmem:[%s10] sm:$0xff]
        %v1221 = vld [vmem:[%s10 + $0x8] sm:$0xff]
        %1223 = vset.pattern.permute.xlu0 0
        %1224 = vperm.xlu0 %1223, %v1220
        %v1225 = vpop.permute.xlu0 %1224
        %1228 = vset.pattern.permute.xlu0 0
        %1229 = vperm.xlu0 %1228, %v1221
        %v1230 = vpop.permute.xlu0 %1229
        %v1232 = vmul.f32 %v1218, %v1225
        %v1233 = vmul.f32 %v1219, %v1230
        %v1234 = vld [vmem:[%s12] sm:$0xff]
        %v1235 = vld [vmem:[%s12 + $0x8] sm:$0xff]
        %1237 = vset.pattern.permute.xlu0 0
        %1238 = vperm.xlu0 %1237, %v1234
        %v1239 = vpop.permute.xlu0 %1238
        %1242 = vset.pattern.permute.xlu0 0
        %1243 = vperm.xlu0 %1242, %v1235
        %v1244 = vpop.permute.xlu0 %1243
        %v1246 = vadd.f32 %v1232, %v1239
        %v1247 = vadd.f32 %v1233, %v1244
        %v1248 = vld [vmem:[%s13] sm:$0xff]
        %v1249 = vld [vmem:[%s13 + $0x8] sm:$0xff]
        %v1250 = vxor.u32 %v1246, 2147483648
        %v1251 = vxor.u32 %v1247, 2147483648
        %v1252 = vmul.f32 %v1250, 1.442695
        %v1253 = vpow.pop %v1252
        %v1254 = vmul.f32 %v1251, 1.442695
        %v1255 = vpow.pop %v1254
        %v1256 = vadd.f32 %v1253, 1.0
        %v1257 = vadd.f32 %v1255, 1.0
        %v1258 = vrcp.pop %v1256
        %v1259 = vmul.f32 1.0, %v1258
        %v1260 = vrcp.pop %v1257
        %v1261 = vmul.f32 1.0, %v1260
        %v1262 = vmul.f32 %v1214, %v1259
        %v1263 = vmul.f32 %v1215, %v1261
        %1265 = vset.pattern.permute.xlu0 0
        %1266 = vperm.xlu0 %1265, %v1248
        %v1267 = vpop.permute.xlu0 %1266
        %1270 = vset.pattern.permute.xlu0 0
        %1271 = vperm.xlu0 %1270, %v1249
        %v1272 = vpop.permute.xlu0 %1271
        %v1274 = vmul.f32 %v1267, %v1262
        %v1275 = vmul.f32 %v1272, %v1263
        %v1276 = vadd.f32 %v818, %v1274
        %v1277 = vadd.f32 %v819, %v1275
        %v1278 = vpack.c.bf16 %v1277, %v1276
        %v1279 = vld [vmem:[%s14] sm:$0xf]
        %v1280 = vld [vmem:[%s14 + $0x4] sm:$0x3]
        %v1283 = vunpack.c.l.b16 %v1279
        %v1284 = vunpack.c.l.b16 %v1280
        %v1285 = vpack.c.b16 %v1284, %v1283
        %v1287 = vsel %vm830, %v1285, 0
        %1289 = vmatprep.subr.bf16.mxu0 0
        %1290 = vmatpush1.bf16.msra.mxu0 0
        %1291 = vmatprep.subr.bf16.mxu0 0
        %1292 = vmatpush1.bf16.msra.mxu0 0
        %1293 = vmatprep.subr.bf16.mxu0 0
        %1294 = vmatpush1.bf16.msra.mxu0 0
        %1295 = vmatprep.subr.bf16.mxu0 0
        %1296 = vmatpush1.bf16.msra.mxu0 0
        %1297 = vmatprep.subr.bf16.mxu0 0
        %1298 = vmatpush1.bf16.msra.mxu0 0
        %1299 = vmatprep.subr.bf16.mxu0 0
        %1300 = vmatpush1.bf16.msra.mxu0 0
        %1301 = vmatprep.subr.bf16.mxu0 0
        %1302 = vmatpush1.bf16.msra.mxu0 0
        %1303 = vmatprep.subr.bf16.mxu0 0
        %1304 = vmatpush1.bf16.msra.mxu0 %v1278
        %1305 = vmatprep.subr.bf16.mxu0 0
        %1306 = vmatpush2.bf16.msra.mxu0 0
        %1307 = vmatprep.subr.bf16.mxu0 0
        %1308 = vmatpush2.bf16.msra.mxu0 0
        %1309 = vmatprep.subr.bf16.mxu0 0
        %1310 = vmatpush2.bf16.msra.mxu0 0
        %1311 = vmatprep.subr.bf16.mxu0 0
        %1312 = vmatpush2.bf16.msra.mxu0 0
        %1313 = vmatprep.subr.bf16.mxu0 0
        %1314 = vmatpush2.bf16.msra.mxu0 0
        %1315 = vmatprep.subr.bf16.mxu0 0
        %1316 = vmatpush2.bf16.msra.mxu0 0
        %1317 = vmatprep.subr.bf16.mxu0 0
        %1318 = vmatpush2.bf16.msra.mxu0 0
        %1319 = vmatprep.subr.bf16.mxu0 0
        %1320 = vmatpush2.bf16.msra.mxu0 0
        %1321 = vmatprep.mubr.bf16.mxu0 0
        %1322 = vmatmul.mubr.bf16.gmra.mxu0 %v1287
        %v1323 = vpop.f32.mrf.mxu0
        %v1324 = vadd.f32 0.0, %v1323
        %v1325 = vpop.f32.mrf.mxu0
        %v1326 = vpop.f32.mrf.mxu0
        %v1327 = vadd.f32 0.0, %v1326
        %v1328 = vpop.f32.mrf.mxu0
        %1329 = vdwg.mxu0
        %1330 = vrot.lane.b32.xlu0 %v1324, 32
        %v1331 = vpop.permute.xlu0 %1330
        %v1332 = vsel %vm875, %v1331, %v1324
        %1333 = vrot.lane.b32.xlu0 %v1332, 32
        %v1334 = vpop.permute.xlu0 %1333
        %v1335 = vsel %vm875, %v1334, %v1324
        %vm1336 = vcmp.ge.s32.totalorder %v821, 2
        %v1337 = vsel %vm1336, 1, 0
        %vm1338 = vcmp.eq.s32.totalorder %v1337, 1
        %1340 = vrot.lane.b32.xlu0 %v1335, 98
        %v1341 = vpop.permute.xlu0 %1340
        %v1343 = vsel %vm1338, %v1341, 0.0
        %v1345 = vrot.slane %v1343, 4
        %v1347 = vadd.f32 %v1324, %v1345
        %1348 = vrot.lane.b32.xlu0 %v1327, 32
        %v1349 = vpop.permute.xlu0 %1348
        %v1350 = vsel %vm875, %v1349, %v1327
        %1351 = vrot.lane.b32.xlu0 %v1350, 32
        %v1352 = vpop.permute.xlu0 %1351
        %v1353 = vsel %vm875, %v1352, %v1327
        %vm1354 = vcmp.lt.s32.totalorder %v821, 30
        %v1355 = vsel %vm1354, 1, 0
        %vm1356 = vcmp.eq.s32.totalorder %v1355, 1
        %1358 = vrot.lane.b32.xlu0 %v1353, 126
        %v1359 = vpop.permute.xlu0 %1358
        %v1361 = vsel %vm1356, %v1359, 0.0
        %v1363 = vrot.slane %v1361, 4
        %v1365 = vadd.f32 %v1347, %v1363
        %v1366 = vld [vmem:[%s15] sm:$0xf]
        %1368 = vset.pattern.permute.xlu0 0
        %1369 = vperm.xlu0 %1368, %v1366
        %v1370 = vpop.permute.xlu0 %1369
        %v1371 = vrot.slane %v1370, 4
        %v1373 = vadd.f32 %v1365, %v1371
        %v1374 = vld [vmem:[%s16] sm:$0xf]
        %v1375 = vld [vmem:[%s17] sm:$0xf]
        %v1377 = vrot.slane %v1373, 4
        %v1379 = vsel %vm925, %v1377, 0.0
        %1380 = vadd.xlane.f32.xlu0 %v1379
        %v1381 = vpop.xlane.xlu0 %1380
        %v1382 = vrot.slane %v1381, 4
        %v1383 = vadd.f32 %v1381, %v1382
        %v1384 = vrot.slane %v1383, 2
        %v1385 = vadd.f32 %v1383, %v1384
        %v1386 = vrot.slane %v1385, 1
        %v1387 = vadd.f32 %v1385, %v1386
        %s1388 = vtos %v1387
        %v1389 = vstv %s1388
        %v1390 = vmul.f32 %v1373, %v1373
        %v1392 = vrot.slane %v1390, 4
        %v1394 = vsel %vm925, %v1392, 0.0
        %1395 = vadd.xlane.f32.xlu0 %v1394
        %v1396 = vpop.xlane.xlu0 %1395
        %v1397 = vrot.slane %v1396, 4
        %v1398 = vadd.f32 %v1396, %v1397
        %v1399 = vrot.slane %v1398, 2
        %v1400 = vadd.f32 %v1398, %v1399
        %v1401 = vrot.slane %v1400, 1
        %v1402 = vadd.f32 %v1400, %v1401
        %s1403 = vtos %v1402
        %v1404 = vstv %s1403
        %v1405 = vmul.f32 %v1389, 0.0078125
        %v1406 = vmul.f32 %v1404, 0.0078125
        %v1407 = vmul.f32 %v1405, %v1405
        %v1408 = vsub.f32 %v1406, %v1407
        %v1409 = vmax.f32 %v1408, 0.0
        %v1410 = vsub.f32 %v1373, %v1405
        %v1411 = vadd.f32 %v1409, 1e-05
        %v1412 = vrsqrt.pop %v1411
        %v1413 = vmul.f32 %v1410, %v1412
        %1415 = vset.pattern.permute.xlu0 0
        %1416 = vperm.xlu0 %1415, %v1374
        %v1417 = vpop.permute.xlu0 %1416
        %v1418 = vrot.slane %v1417, 4
        %v1420 = vmul.f32 %v1413, %v1418
        %1422 = vset.pattern.permute.xlu0 0
        %1423 = vperm.xlu0 %1422, %v1375
        %v1424 = vpop.permute.xlu0 %1423
        %v1425 = vrot.slane %v1424, 4
        %v1427 = vadd.f32 %v1420, %v1425
        %v1428 = vmul.f32 %v1427, 0.5
        %v1429 = vmul.f32 %v1427, 0.044715
        %v1430 = vmul.f32 %v1429, %v1427
        %v1431 = vmul.f32 %v1430, %v1427
        %v1432 = vadd.f32 %v1427, %v1431
        %v1433 = vmul.f32 %v1432, 0.7978846
        %v1434 = vtanh.pop %v1433
        %v1435 = vadd.f32 %v1434, 1.0
        %v1436 = vmul.f32 %v1428, %v1435
        %v1437 = vpack.c.bf16 %v1436, %v1436
        %v1438 = vld [vmem:[%s18] sm:$0xf]
        %v1439 = vld [vmem:[%s18 + $0x4] sm:$0xf]
        %v1440 = vld [vmem:[%s20] sm:$0xff]
        %v1441 = vld [vmem:[%s20 + $0x8] sm:$0xff]
        %1443 = vset.pattern.permute.xlu0 0
        %1444 = vperm.xlu0 %1443, %v1440
        %v1445 = vpop.permute.xlu0 %1444
        %1448 = vset.pattern.permute.xlu0 0
        %1449 = vperm.xlu0 %1448, %v1441
        %v1450 = vpop.permute.xlu0 %1449
        %v1454 = vunpack.c.l.b16 %v1438
        %v1455 = vunpack.c.l.b16 %v1439
        %v1456 = vpack.c.b16 %v1455, %v1454
        %v1458 = vrot.slane %v1437, 2
        %v1460 = vsel %vm1006, %v1456, 0
        %v1463 = vsel %vm1010, %v1458, 0
        %1465 = vmatprep.subr.bf16.mxu0 0
        %1466 = vmatpush1.bf16.msra.mxu0 0
        %1467 = vmatprep.subr.bf16.mxu0 0
        %1468 = vmatpush1.bf16.msra.mxu0 0
        %1469 = vmatprep.subr.bf16.mxu0 0
        %1470 = vmatpush1.bf16.msra.mxu0 0
        %1471 = vmatprep.subr.bf16.mxu0 0
        %1472 = vmatpush1.bf16.msra.mxu0 0
        %1473 = vmatprep.subr.bf16.mxu0 0
        %1474 = vmatpush1.bf16.msra.mxu0 0
        %1475 = vmatprep.subr.bf16.mxu0 0
        %1476 = vmatpush1.bf16.msra.mxu0 0
        %1477 = vmatprep.subr.bf16.mxu0 0
        %1478 = vmatpush1.bf16.msra.mxu0 0
        %1479 = vmatprep.subr.bf16.mxu0 0
        %1480 = vmatpush1.bf16.msra.mxu0 %v1463
        %1481 = vmatprep.subr.bf16.mxu0 0
        %1482 = vmatpush2.bf16.msra.mxu0 0
        %1483 = vmatprep.subr.bf16.mxu0 0
        %1484 = vmatpush2.bf16.msra.mxu0 0
        %1485 = vmatprep.subr.bf16.mxu0 0
        %1486 = vmatpush2.bf16.msra.mxu0 0
        %1487 = vmatprep.subr.bf16.mxu0 0
        %1488 = vmatpush2.bf16.msra.mxu0 0
        %1489 = vmatprep.subr.bf16.mxu0 0
        %1490 = vmatpush2.bf16.msra.mxu0 0
        %1491 = vmatprep.subr.bf16.mxu0 0
        %1492 = vmatpush2.bf16.msra.mxu0 0
        %1493 = vmatprep.subr.bf16.mxu0 0
        %1494 = vmatpush2.bf16.msra.mxu0 0
        %1495 = vmatprep.subr.bf16.mxu0 0
        %1496 = vmatpush2.bf16.msra.mxu0 0
        %1497 = vmatprep.mubr.bf16.mxu0 0
        %1498 = vmatmul.mubr.bf16.gmra.mxu0 %v1460
        %v1499 = vpop.f32.mrf.mxu0
        %v1500 = vadd.f32 %v1445, %v1499
        %v1501 = vpop.f32.mrf.mxu0
        %v1502 = vpop.f32.mrf.mxu0
        %v1503 = vadd.f32 %v1450, %v1502
        %v1504 = vpop.f32.mrf.mxu0
        %1505 = vdwg.mxu0
        %v1506 = vld [vmem:[%s19] sm:$0xf]
        %v1507 = vld [vmem:[%s19 + $0x4] sm:$0xf]
        %v1508 = vld [vmem:[%s21] sm:$0xff]
        %v1509 = vld [vmem:[%s21 + $0x8] sm:$0xff]
        %1511 = vset.pattern.permute.xlu0 0
        %1512 = vperm.xlu0 %1511, %v1508
        %v1513 = vpop.permute.xlu0 %1512
        %1516 = vset.pattern.permute.xlu0 0
        %1517 = vperm.xlu0 %1516, %v1509
        %v1518 = vpop.permute.xlu0 %1517
        %v1522 = vunpack.c.l.b16 %v1506
        %v1523 = vunpack.c.l.b16 %v1507
        %v1524 = vpack.c.b16 %v1523, %v1522
        %v1526 = vsel %vm1006, %v1524, 0
        %1528 = vmatprep.subr.bf16.mxu0 0
        %1529 = vmatpush1.bf16.msra.mxu0 0
        %1530 = vmatprep.subr.bf16.mxu0 0
        %1531 = vmatpush1.bf16.msra.mxu0 0
        %1532 = vmatprep.subr.bf16.mxu0 0
        %1533 = vmatpush1.bf16.msra.mxu0 0
        %1534 = vmatprep.subr.bf16.mxu0 0
        %1535 = vmatpush1.bf16.msra.mxu0 0
        %1536 = vmatprep.subr.bf16.mxu0 0
        %1537 = vmatpush1.bf16.msra.mxu0 0
        %1538 = vmatprep.subr.bf16.mxu0 0
        %1539 = vmatpush1.bf16.msra.mxu0 0
        %1540 = vmatprep.subr.bf16.mxu0 0
        %1541 = vmatpush1.bf16.msra.mxu0 0
        %1542 = vmatprep.subr.bf16.mxu0 0
        %1543 = vmatpush1.bf16.msra.mxu0 %v1463
        %1544 = vmatprep.subr.bf16.mxu0 0
        %1545 = vmatpush2.bf16.msra.mxu0 0
        %1546 = vmatprep.subr.bf16.mxu0 0
        %1547 = vmatpush2.bf16.msra.mxu0 0
        %1548 = vmatprep.subr.bf16.mxu0 0
        %1549 = vmatpush2.bf16.msra.mxu0 0
        %1550 = vmatprep.subr.bf16.mxu0 0
        %1551 = vmatpush2.bf16.msra.mxu0 0
        %1552 = vmatprep.subr.bf16.mxu0 0
        %1553 = vmatpush2.bf16.msra.mxu0 0
        %1554 = vmatprep.subr.bf16.mxu0 0
        %1555 = vmatpush2.bf16.msra.mxu0 0
        %1556 = vmatprep.subr.bf16.mxu0 0
        %1557 = vmatpush2.bf16.msra.mxu0 0
        %1558 = vmatprep.subr.bf16.mxu0 0
        %1559 = vmatpush2.bf16.msra.mxu0 0
        %1560 = vmatprep.mubr.bf16.mxu0 0
        %1561 = vmatmul.mubr.bf16.gmra.mxu0 %v1526
        %v1562 = vpop.f32.mrf.mxu0
        %v1563 = vadd.f32 %v1513, %v1562
        %v1564 = vpop.f32.mrf.mxu0
        %v1565 = vpop.f32.mrf.mxu0
        %v1566 = vadd.f32 %v1518, %v1565
        %v1567 = vpop.f32.mrf.mxu0
        %1568 = vdwg.mxu0
        %v1569 = vsel %vm1118, %v1500, 0.0
        %v1570 = vsel %vm1118, %v1503, 0.0
        %v1571 = vadd.f32 %v1569, %v1570
        %1572 = vadd.xlane.f32.xlu0 %v1571
        %v1573 = vpop.xlane.xlu0 %1572
        %v1574 = vrot.slane %v1573, 4
        %v1575 = vadd.f32 %v1573, %v1574
        %v1576 = vrot.slane %v1575, 2
        %v1577 = vadd.f32 %v1575, %v1576
        %v1578 = vrot.slane %v1577, 1
        %v1579 = vadd.f32 %v1577, %v1578
        %s1580 = vtos %v1579
        %v1581 = vstv %s1580
        %v1582 = vsel %vm1118, %v1563, 0.0
        %v1583 = vsel %vm1118, %v1566, 0.0
        %v1584 = vadd.f32 %v1582, %v1583
        %1585 = vadd.xlane.f32.xlu0 %v1584
        %v1586 = vpop.xlane.xlu0 %1585
        %v1587 = vrot.slane %v1586, 4
        %v1588 = vadd.f32 %v1586, %v1587
        %v1589 = vrot.slane %v1588, 2
        %v1590 = vadd.f32 %v1588, %v1589
        %v1591 = vrot.slane %v1590, 1
        %v1592 = vadd.f32 %v1590, %v1591
        %s1593 = vtos %v1592
        %v1594 = vstv %s1593
        %v1595 = vadd.f32 %v1581, %v1594
        %v1596 = vmul.f32 %v1500, %v1500
        %v1597 = vmul.f32 %v1503, %v1503
        %v1598 = vsel %vm1118, %v1596, 0.0
        %v1599 = vsel %vm1118, %v1597, 0.0
        %v1600 = vadd.f32 %v1598, %v1599
        %1601 = vadd.xlane.f32.xlu0 %v1600
        %v1602 = vpop.xlane.xlu0 %1601
        %v1603 = vrot.slane %v1602, 4
        %v1604 = vadd.f32 %v1602, %v1603
        %v1605 = vrot.slane %v1604, 2
        %v1606 = vadd.f32 %v1604, %v1605
        %v1607 = vrot.slane %v1606, 1
        %v1608 = vadd.f32 %v1606, %v1607
        %s1609 = vtos %v1608
        %v1610 = vstv %s1609
        %v1611 = vmul.f32 %v1563, %v1563
        %v1612 = vmul.f32 %v1566, %v1566
        %v1613 = vsel %vm1118, %v1611, 0.0
        %v1614 = vsel %vm1118, %v1612, 0.0
        %v1615 = vadd.f32 %v1613, %v1614
        %1616 = vadd.xlane.f32.xlu0 %v1615
        %v1617 = vpop.xlane.xlu0 %1616
        %v1618 = vrot.slane %v1617, 4
        %v1619 = vadd.f32 %v1617, %v1618
        %v1620 = vrot.slane %v1619, 2
        %v1621 = vadd.f32 %v1619, %v1620
        %v1622 = vrot.slane %v1621, 1
        %v1623 = vadd.f32 %v1621, %v1622
        %s1624 = vtos %v1623
        %v1625 = vstv %s1624
        %v1626 = vadd.f32 %v1610, %v1625
        %v1627 = vmul.f32 %v1595, 0.0009765625
        %v1628 = vmul.f32 %v1626, 0.0009765625
        %v1629 = vmul.f32 %v1627, %v1627
        %v1630 = vsub.f32 %v1628, %v1629
        %v1631 = vmax.f32 %v1630, 0.0
        %v1632 = vadd.f32 %v1631, 1e-05
        %v1633 = vrsqrt.pop %v1632
        %v1634 = vsub.f32 %v1500, %v1627
        %v1635 = vsub.f32 %v1503, %v1627
        %v1636 = vmul.f32 %v1634, %v1633
        %v1637 = vmul.f32 %v1635, %v1633
        %v1638 = vld [vmem:[%s22] sm:$0xff]
        %v1639 = vld [vmem:[%s22 + $0x8] sm:$0xff]
        %1641 = vset.pattern.permute.xlu0 0
        %1642 = vperm.xlu0 %1641, %v1638
        %v1643 = vpop.permute.xlu0 %1642
        %1646 = vset.pattern.permute.xlu0 0
        %1647 = vperm.xlu0 %1646, %v1639
        %v1648 = vpop.permute.xlu0 %1647
        %v1650 = vmul.f32 %v1636, %v1643
        %v1651 = vmul.f32 %v1637, %v1648
        %v1652 = vld [vmem:[%s24] sm:$0xff]
        %v1653 = vld [vmem:[%s24 + $0x8] sm:$0xff]
        %1655 = vset.pattern.permute.xlu0 0
        %1656 = vperm.xlu0 %1655, %v1652
        %v1657 = vpop.permute.xlu0 %1656
        %1660 = vset.pattern.permute.xlu0 0
        %1661 = vperm.xlu0 %1660, %v1653
        %v1662 = vpop.permute.xlu0 %1661
        %v1664 = vadd.f32 %v1650, %v1657
        %v1665 = vadd.f32 %v1651, %v1662
        %v1666 = vsub.f32 %v1563, %v1627
        %v1667 = vsub.f32 %v1566, %v1627
        %v1668 = vmul.f32 %v1666, %v1633
        %v1669 = vmul.f32 %v1667, %v1633
        %v1670 = vld [vmem:[%s23] sm:$0xff]
        %v1671 = vld [vmem:[%s23 + $0x8] sm:$0xff]
        %1673 = vset.pattern.permute.xlu0 0
        %1674 = vperm.xlu0 %1673, %v1670
        %v1675 = vpop.permute.xlu0 %1674
        %1678 = vset.pattern.permute.xlu0 0
        %1679 = vperm.xlu0 %1678, %v1671
        %v1680 = vpop.permute.xlu0 %1679
        %v1682 = vmul.f32 %v1668, %v1675
        %v1683 = vmul.f32 %v1669, %v1680
        %v1684 = vld [vmem:[%s25] sm:$0xff]
        %v1685 = vld [vmem:[%s25 + $0x8] sm:$0xff]
        %1687 = vset.pattern.permute.xlu0 0
        %1688 = vperm.xlu0 %1687, %v1684
        %v1689 = vpop.permute.xlu0 %1688
        %1692 = vset.pattern.permute.xlu0 0
        %1693 = vperm.xlu0 %1692, %v1685
        %v1694 = vpop.permute.xlu0 %1693
        %v1696 = vadd.f32 %v1682, %v1689
        %v1697 = vadd.f32 %v1683, %v1694
        %v1698 = vld [vmem:[%s26] sm:$0xff]
        %v1699 = vld [vmem:[%s26 + $0x8] sm:$0xff]
        %v1700 = vxor.u32 %v1696, 2147483648
        %v1701 = vxor.u32 %v1697, 2147483648
        %v1702 = vmul.f32 %v1700, 1.442695
        %v1703 = vpow.pop %v1702
        %v1704 = vmul.f32 %v1701, 1.442695
        %v1705 = vpow.pop %v1704
        %v1706 = vadd.f32 %v1703, 1.0
        %v1707 = vadd.f32 %v1705, 1.0
        %v1708 = vrcp.pop %v1706
        %v1709 = vmul.f32 1.0, %v1708
        %v1710 = vrcp.pop %v1707
        %v1711 = vmul.f32 1.0, %v1710
        %v1712 = vmul.f32 %v1664, %v1709
        %v1713 = vmul.f32 %v1665, %v1711
        %1715 = vset.pattern.permute.xlu0 0
        %1716 = vperm.xlu0 %1715, %v1698
        %v1717 = vpop.permute.xlu0 %1716
        %1720 = vset.pattern.permute.xlu0 0
        %1721 = vperm.xlu0 %1720, %v1699
        %v1722 = vpop.permute.xlu0 %1721
        %v1724 = vmul.f32 %v1717, %v1712
        %v1725 = vmul.f32 %v1722, %v1713
        %v1726 = vadd.f32 %v1276, %v1724
        %v1727 = vadd.f32 %v1277, %v1725
        %1728 = vst.msk [vmem:[%s811] sm:$0xff] %vm1118, %v1726
        %1729 = vst.msk [vmem:[%s811 + $0x8] sm:$0xff] %vm1118, %v1727
        %s1730 = sand.u32 %s621, 1
        %s1731 = scalar_lea.sflag [#allocation3], %s1730
        %s1732 = sand.u32 %s621, 1
        %s1733 = smul.addr %s1732, 16
        %s1734 = scalar_lea.vmem [#allocation2], %s1733
        // Predicated region
        $region129: #{tpu_custom_call.1} parent=127 // pred_check
          %p1735 = pneg %p631
        $region130: #{tpu_custom_call.1} parent=127 // pred_check_branch
          %1737 = sbr.rel (%p1735) target = $region132
        $region131: #{tpu_custom_call.1} parent=127 // pred_region
          %s1739 = ssub.s32 256, 256
          %1740 = vsyncadd %s1731, %s1739
          %s1741 = smul.addr %s41, 2
          %s1742 = smul.addr %s1741, 128
          %s1743 = scalar_lea.hbm %s27, %s1742
          %s1744 = sshll.u32 %s1734, 4
          %s1745 = int_to_ptr.vmem [resolvable:$true] %s1744
          %1750 = dma.vmem_to_hbm [thread:$0]  %s1745, 256, %s1743, %s1731, 128, 128, 8
        $region132: #{tpu_custom_call.1} parent=127 // pred_fallthru
          _
      $region128: #{tpu_custom_call.1} parent=5 // pred_fallthru
        _
      %p1751 = scmp.le.s32.totalorder 2, %s36
      // Predicated region
      $region133: #{tpu_custom_call.1} parent=5 // pred_check
        %p1752 = pneg %p1751
      $region134: #{tpu_custom_call.1} parent=5 // pred_check_branch
        %1754 = sbr.rel (%p1752) target = $region136
      $region135: #{tpu_custom_call.1} parent=5 // pred_region
        %s1755 = ssub.s32 %s36, 2
        // Predicated region
        $region137: #{tpu_custom_call.1} parent=135 // pred_check
          %p1756 = pneg %p637
        $region138: #{tpu_custom_call.1} parent=135 // pred_check_branch
          %1758 = sbr.rel (%p1756) target = $region140
        $region139: #{tpu_custom_call.1} parent=135 // pred_region
          %s1759 = sand.u32 %s622, 1
          %s1760 = scalar_lea.sflag [#allocation3], %s1759
          %s1761 = sand.u32 %s622, 1
          %s1762 = smul.addr %s1761, 16
          %s1763 = scalar_lea.vmem [#allocation2], %s1762
          %1764 = dma.done %s1760, 256
        $region140: #{tpu_custom_call.1} parent=135 // pred_fallthru
          _
      $region136: #{tpu_custom_call.1} parent=5 // pred_fallthru
        _
    $region6: #{tpu_custom_call.1} parent=1 // loop_footer
      %s40 = sadd.s32 1, %s36
    $region7: #{tpu_custom_call.1} parent=1 // loop_footer_branch
      %35 = sbr.rel target = $region3
    $region8: #{tpu_custom_call.1} parent=1 // loop_exit
      _
    %1765 = vsyncpa [#allocation3], 1
    %s1766 = scalar_lea.sflag [#allocation3], 1
    %1767 = vsyncpa %s1766, 1

</llo_original>
